<compile_context>
chip_gen: v5e
topology: v5e:2x2
jax: 0.10.0
libtpu: 0.0.40
codegen_flags: <defaults>
</compile_context>

<pallas_src>
import functools

import jax
import jax.numpy as jnp
from jax.experimental import pallas as pl
from jax.experimental.pallas import tpu as pltpu


# ---------------------------------------------------------------------------
# Kernel 1: fused Q/K/V projection (runs once per x tile, never recomputed).
# ---------------------------------------------------------------------------
def _qkv_proj_kernel(x_ref, w_ref, q_ref, k_ref, v_ref, *, hp):
    # x_ref: (tp, C) bf16
    # w_ref: (C, 3*hp) bf16 fused [Wq*scale | Wk | Wv], zero-padded to hp lanes each
    qkv = jnp.dot(x_ref[...], w_ref[...], preferred_element_type=jnp.float32)
    q_ref[...] = qkv[:, :hp].astype(q_ref.dtype)
    k_ref[...] = qkv[:, hp:2 * hp].astype(k_ref.dtype)
    v_ref[...] = qkv[:, 2 * hp:].astype(v_ref.dtype)


# ---------------------------------------------------------------------------
# Kernel 2: causal flash attention on precomputed bf16 Q/K/V.
# ---------------------------------------------------------------------------
def _attn_kernel(q_ref, k_ref, v_ref, o_ref, m_sc, l_sc, acc_sc, *, tq, tk):
    # q_ref: (tq, Hp) bf16 (scale already folded into W_q)
    # k_ref, v_ref: (tk, Hp) bf16
    # o_ref: (tq, Hp) f32 lane-dense output tile
    qi = pl.program_id(1)
    ki = pl.program_id(2)

    # Last kv block containing any unmasked (causal) column for this q tile.
    last_k = ((qi + 1) * tq - 1) // tk
    # Fully below the diagonal -> no masking needed.
    interior = (ki + 1) * tk - 1 <= qi * tq
    # Straddles the diagonal -> needs the causal mask.  (tq == tk enforced.)
    diagonal = jnp.logical_and(jnp.logical_not(interior), ki <= last_k)

    @pl.when(ki == 0)
    def _init():
        m_sc[...] = jnp.full_like(m_sc, -jnp.inf)
        l_sc[...] = jnp.zeros_like(l_sc)
        acc_sc[...] = jnp.zeros_like(acc_sc)

    def _scores():
        # QK^T with the transpose absorbed into the contraction (no k.T).
        return jax.lax.dot_general(
            q_ref[...], k_ref[...],
            dimension_numbers=(((1,), (1,)), ((), ())),
            preferred_element_type=jnp.float32)          # (tq, tk) f32

    def _online_softmax_update(s):
        m_prev = m_sc[...]
        m_new = jnp.maximum(m_prev, s.max(axis=-1, keepdims=True))
        alpha = jnp.exp(m_prev - m_new)
        p = jnp.exp(s - m_new)
        l_sc[...] = alpha * l_sc[...] + p.sum(axis=-1, keepdims=True)
        acc_sc[...] = alpha * acc_sc[...] + jnp.dot(
            p.astype(jnp.bfloat16), v_ref[...],
            preferred_element_type=jnp.float32)
        m_sc[...] = m_new

    @pl.when(interior)
    def _interior():
        _online_softmax_update(_scores())

    @pl.when(diagonal)
    def _diag():
        s = _scores()
        row = qi * tq + jax.lax.broadcasted_iota(jnp.int32, (tq, tk), 0)
        col = ki * tk + jax.lax.broadcasted_iota(jnp.int32, (tq, tk), 1)
        # NOTE: ki==0 is always (partially) visible, so m never stays -inf.
        _online_softmax_update(jnp.where(col <= row, s, -jnp.inf))

    @pl.when(ki == last_k)
    def _finalize():
        o_ref[...] = (acc_sc[...] *
                      pl.reciprocal(l_sc[...], approx=True)).astype(o_ref.dtype)


def _pick_tile(T):
    if T <= 512:
        return T                      # grid (B, 1, 1): no step overhead at all
    for t in (512, 256, 128):
        if T % t == 0:
            return t
    # TODO(synk): ragged T (not a multiple of 128) via masked tail blocks.
    return T


def head_forward(x, w_key, w_query, w_value):
    """Single-head causal self-attention (eval mode, dropout == identity).

    x:        (B, T, C) float32
    w_key, w_query, w_value: (H, C) float32  (PyTorch nn.Linear weight layout)
    returns:  (B, T, H) float32
    """
    B, T, C = x.shape
    H = w_key.shape[0]
    Hp = max(128, ((H + 127) // 128) * 128)      # lane-dense padded head size

    tile = _pick_tile(T)
    tq = tk = tile
    assert T % tq == 0

    scale = float(H) ** -0.5                     # module uses k.shape[-1] == H

    # Fuse + pad weights into one (C, 3*Hp) bf16 matrix: [Wq*scale | Wk | Wv].
    # 1/sqrt(H) is folded into W_q here (one-time transform, free at runtime).
    def _pad(w):
        wt = jnp.pad(w.T, ((0, 0), (0, Hp - H)))   # (C, Hp) f32
        return wt.astype(jnp.bfloat16)

    w_fused = jnp.concatenate(
        [_pad(w_query * scale), _pad(w_key), _pad(w_value)], axis=1)
    x_bf = x.astype(jnp.bfloat16)

    # ---- pass 1: project Q/K/V once per row of x ----
    tp = tile
    q, k, v = pl.pallas_call(
        functools.partial(_qkv_proj_kernel, hp=Hp),
        out_shape=(
            jax.ShapeDtypeStruct((B, T, Hp), jnp.bfloat16),
            jax.ShapeDtypeStruct((B, T, Hp), jnp.bfloat16),
            jax.ShapeDtypeStruct((B, T, Hp), jnp.bfloat16),
        ),
        grid_spec=pltpu.PrefetchScalarGridSpec(
            num_scalar_prefetch=0,
            grid=(B, T // tp),
            in_specs=[
                pl.BlockSpec((None, tp, C), lambda b, i: (b, i, 0)),
                pl.BlockSpec((C, 3 * Hp), lambda b, i: (0, 0)),
            ],
            out_specs=[
                pl.BlockSpec((None, tp, Hp), lambda b, i: (b, i, 0)),
                pl.BlockSpec((None, tp, Hp), lambda b, i: (b, i, 0)),
                pl.BlockSpec((None, tp, Hp), lambda b, i: (b, i, 0)),
            ],
        ),
        compiler_params=pltpu.CompilerParams(
            dimension_semantics=("parallel", "parallel")),
        cost_estimate=pl.CostEstimate(
            flops=2 * B * T * C * 3 * Hp,
            transcendentals=0,
            bytes_accessed=(B * T * C * 2 + C * 3 * Hp * 2
                            + 3 * B * T * Hp * 2)),
    )(x_bf, w_fused)

    # ---- pass 2: causal flash attention ----
    n_kv = T // tk

    def _kv_map(b, qi, ki):
        # Clamp so fully-masked blocks above the diagonal keep the previous
        # block index -> Pallas skips the re-fetch (no wasted DMA).
        return (b, jnp.minimum(ki, ((qi + 1) * tq - 1) // tk), 0)

    kv_reads = max(1, (T // tq + 1) // 2)        # avg kv re-reads per q tile
    out_padded = pl.pallas_call(
        functools.partial(_attn_kernel, tq=tq, tk=tk),
        out_shape=jax.ShapeDtypeStruct((B, T, Hp), jnp.float32),
        grid_spec=pltpu.PrefetchScalarGridSpec(
            num_scalar_prefetch=0,
            grid=(B, T // tq, n_kv),
            in_specs=[
                pl.BlockSpec((None, tq, Hp), lambda b, qi, ki: (b, qi, 0)),
                pl.BlockSpec((None, tk, Hp), _kv_map),
                pl.BlockSpec((None, tk, Hp), _kv_map),
            ],
            out_specs=pl.BlockSpec((None, tq, Hp), lambda b, qi, ki: (b, qi, 0)),
            scratch_shapes=[
                pltpu.VMEM((tq, 1), jnp.float32),    # running max
                pltpu.VMEM((tq, 1), jnp.float32),    # running sum
                pltpu.VMEM((tq, Hp), jnp.float32),   # output accumulator
            ],
        ),
        compiler_params=pltpu.CompilerParams(
            dimension_semantics=("parallel", "parallel", "arbitrary")),
        cost_estimate=pl.CostEstimate(
            flops=2 * B * T * T * Hp,                 # ~causal half of QK^T + PV
            transcendentals=B * T * T // 2,
            bytes_accessed=(B * T * Hp * 2            # q
                            + 2 * B * T * Hp * 2 * kv_reads   # k, v re-streams
                            + B * T * Hp * 4)),       # padded f32 output
    )(q, k, v)

    # TODO(synk): downstream consumers could take the padded (B,T,Hp) slab (or
    # bf16) directly to avoid this copy; the module contract is (B,T,H) f32.
    return out_padded[..., :H]


def head_reference(x, w_key, w_query, w_value):
    """Pure-JAX f32 reference matching the PyTorch forward (eval mode)."""
    k = x @ w_key.T
    q = x @ w_query.T
    v = x @ w_value.T
    H = k.shape[-1]
    wei = (q @ jnp.swapaxes(k, -2, -1)) * (H ** -0.5)
    T = x.shape[1]
    mask = jnp.tril(jnp.ones((T, T), dtype=bool))
    wei = jnp.where(mask, wei, -jnp.inf)
    wei = jax.nn.softmax(wei, axis=-1)
    return wei @ v


if __name__ == "__main__":
    # Small config consistent with the module: n_embed=384, n_head=6 -> head_size=64
    B, T, C = 2, 256, 384
    n_head = 6
    H = C // n_head

    key = jax.random.PRNGKey(0)
    kx, kk, kq, kv = jax.random.split(key, 4)

    x = jax.random.normal(kx, (B, T, C), dtype=jnp.float32)
    # nn.Linear(C, H, bias=False) weights: shape (H, C)
    lim = 1.0 / float(C) ** 0.5
    w_key = jax.random.uniform(kk, (H, C), jnp.float32, -lim, lim)
    w_query = jax.random.uniform(kq, (H, C), jnp.float32, -lim, lim)
    w_value = jax.random.uniform(kv, (H, C), jnp.float32, -lim, lim)

    out = head_forward(x, w_key, w_query, w_value)
    out = jax.block_until_ready(out)

    ref = head_reference(x, w_key, w_query, w_value)
    assert out.shape == (B, T, H)
    # bf16 MXU operands with f32 accumulation -> compare loosely vs f32 reference.
    assert jnp.allclose(out, ref, atol=5e-2, rtol=5e-2), "mismatch vs reference"

    print("KERNEL_OK")
</pallas_src>

<mosaic_0001>
module attributes {stable_mosaic.version = 11 : i64} {
  func.func @_qkv_proj_kernel(%arg0: i32, %arg1: i32, %arg2: memref<1x256x384xbf16, #tpu.memory_space<vmem>>, %arg3: memref<384x384xbf16, #tpu.memory_space<vmem>>, %arg4: memref<1x256x128xbf16, #tpu.memory_space<vmem>>, %arg5: memref<1x256x128xbf16, #tpu.memory_space<vmem>>, %arg6: memref<1x256x128xbf16, #tpu.memory_space<vmem>>) attributes {dimension_semantics = [#tpu.dimension_semantics<parallel>, #tpu.dimension_semantics<parallel>], iteration_bounds = array<i64: 2, 1>, scalar_prefetch = 0 : i64, scratch_operands = 0 : i64, tpu.core_type = #tpu.core_type<tc>, window_params = [{transform_indices = @transform_0, window_bounds = array<i64: 1, 256, 384>}, {pipeline_mode = #tpu.pipeline_mode<synchronous>, transform_indices = @transform_1, window_bounds = array<i64: 384, 384>}, {transform_indices = @transform_2, window_bounds = array<i64: 1, 256, 128>}, {transform_indices = @transform_3, window_bounds = array<i64: 1, 256, 128>}, {transform_indices = @transform_4, window_bounds = array<i64: 1, 256, 128>}]} {
    %c0 = arith.constant 0 : index
    %c0_0 = arith.constant 0 : index
    %c0_1 = arith.constant 0 : index
    %0 = vector.load %arg2[%c0, %c0_0, %c0_1] : memref<1x256x384xbf16, #tpu.memory_space<vmem>>, vector<1x256x384xbf16>
    %1 = vector.shape_cast %0 : vector<1x256x384xbf16> to vector<256x384xbf16>
    %c0_2 = arith.constant 0 : index
    %c0_3 = arith.constant 0 : index
    %2 = vector.load %arg3[%c0_2, %c0_3] : memref<384x384xbf16, #tpu.memory_space<vmem>>, vector<384x384xbf16>
    %cst = arith.constant dense<0.000000e+00> : vector<256x384xf32>
    %3 = tpu.matmul %1, %2, %cst {dimension_numbers = #tpu.dot_dimension_numbers<[1], [0], [0], [1], [0, 0, 1, 1], [], []>} : vector<256x384xbf16>, vector<384x384xbf16>, vector<256x384xf32> -> vector<256x384xf32>
    %4 = vector.extract_strided_slice %3 {offsets = [0, 0], sizes = [256, 128], strides = [1, 1]} : vector<256x384xf32> to vector<256x128xf32>
    %5 = arith.truncf %4 : vector<256x128xf32> to vector<256x128xbf16>
    %c0_4 = arith.constant 0 : index
    %c0_5 = arith.constant 0 : index
    %c0_6 = arith.constant 0 : index
    %6 = vector.load %arg4[%c0_4, %c0_5, %c0_6] : memref<1x256x128xbf16, #tpu.memory_space<vmem>>, vector<1x256x128xbf16>
    %7 = vector.shape_cast %6 : vector<1x256x128xbf16> to vector<256x128xbf16>
    %8 = vector.shape_cast %5 : vector<256x128xbf16> to vector<1x256x128xbf16>
    tpu.vector_store %arg4[%c0_4, %c0_5, %c0_6], %8 {strides = array<i32>} : memref<1x256x128xbf16, #tpu.memory_space<vmem>>, vector<1x256x128xbf16>,
    %9 = vector.extract_strided_slice %3 {offsets = [0, 128], sizes = [256, 128], strides = [1, 1]} : vector<256x384xf32> to vector<256x128xf32>
    %10 = arith.truncf %9 : vector<256x128xf32> to vector<256x128xbf16>
    %c0_7 = arith.constant 0 : index
    %c0_8 = arith.constant 0 : index
    %c0_9 = arith.constant 0 : index
    %11 = vector.load %arg5[%c0_7, %c0_8, %c0_9] : memref<1x256x128xbf16, #tpu.memory_space<vmem>>, vector<1x256x128xbf16>
    %12 = vector.shape_cast %11 : vector<1x256x128xbf16> to vector<256x128xbf16>
    %13 = vector.shape_cast %10 : vector<256x128xbf16> to vector<1x256x128xbf16>
    tpu.vector_store %arg5[%c0_7, %c0_8, %c0_9], %13 {strides = array<i32>} : memref<1x256x128xbf16, #tpu.memory_space<vmem>>, vector<1x256x128xbf16>,
    %14 = vector.extract_strided_slice %3 {offsets = [0, 256], sizes = [256, 128], strides = [1, 1]} : vector<256x384xf32> to vector<256x128xf32>
    %15 = arith.truncf %14 : vector<256x128xf32> to vector<256x128xbf16>
    %c0_10 = arith.constant 0 : index
    %c0_11 = arith.constant 0 : index
    %c0_12 = arith.constant 0 : index
    %16 = vector.load %arg6[%c0_10, %c0_11, %c0_12] : memref<1x256x128xbf16, #tpu.memory_space<vmem>>, vector<1x256x128xbf16>
    %17 = vector.shape_cast %16 : vector<1x256x128xbf16> to vector<256x128xbf16>
    %18 = vector.shape_cast %15 : vector<256x128xbf16> to vector<1x256x128xbf16>
    tpu.vector_store %arg6[%c0_10, %c0_11, %c0_12], %18 {strides = array<i32>} : memref<1x256x128xbf16, #tpu.memory_space<vmem>>, vector<1x256x128xbf16>,
    return
  }
  func.func @transform_0(%arg0: i32, %arg1: i32) -> (i32, i32, i32) {
    %c0_i32 = arith.constant 0 : i32
    %c0_i32_0 = arith.constant 0 : i32
    return %arg0, %arg1, %c0_i32 : i32, i32, i32
  }
  func.func @transform_1(%arg0: i32, %arg1: i32) -> (i32, i32) {
    %c0_i32 = arith.constant 0 : i32
    %c0_i32_0 = arith.constant 0 : i32
    %c0_i32_1 = arith.constant 0 : i32
    return %c0_i32, %c0_i32_0 : i32, i32
  }
  func.func @transform_2(%arg0: i32, %arg1: i32) -> (i32, i32, i32) {
    %c0_i32 = arith.constant 0 : i32
    %c0_i32_0 = arith.constant 0 : i32
    return %arg0, %arg1, %c0_i32 : i32, i32, i32
  }
  func.func @transform_3(%arg0: i32, %arg1: i32) -> (i32, i32, i32) {
    %c0_i32 = arith.constant 0 : i32
    %c0_i32_0 = arith.constant 0 : i32
    return %arg0, %arg1, %c0_i32 : i32, i32, i32
  }
  func.func @transform_4(%arg0: i32, %arg1: i32) -> (i32, i32, i32) {
    %c0_i32 = arith.constant 0 : i32
    %c0_i32_0 = arith.constant 0 : i32
    return %arg0, %arg1, %c0_i32 : i32, i32, i32
  }
}

</mosaic_0001>

<llo_original>
// kernel: tpu_custom_call.1
$region0: #{tpu_custom_call.1}
  #allocation0 [shape = 'u32[]', space=smem, size = 0x4, offset = 0x4, fixed_abs, tag = 'smem constant byte address 0x4 - core index']
  #allocation1 [shape = 'u32[72,128]{1,0:T(1,128)}', space=vmem, size = 0x9000, scoped, tag = 'internal scratch']
  %s0 = inlined_call_operand.hbm [shape: bf16[2,256,384], index: 0, kind: input, shape index: {}]
  %s1 = inlined_call_operand.hbm [shape: bf16[384,384], index: 1, kind: input, shape index: {}]
  %s2 = inlined_call_operand.hbm [shape: bf16[2,256,128], index: 2, kind: output, shape index: {0}]
  %s3 = inlined_call_operand.hbm [shape: bf16[2,256,128], index: 3, kind: output, shape index: {1}]
  %s4 = inlined_call_operand.hbm [shape: bf16[2,256,128], index: 4, kind: output, shape index: {2}]
  %5 = xla_tuple %s2, %s3, %s4
  %s6 = sld [smem:[#allocation0]]
  $region65: #{tpu_custom_call.1} parent=0
    _
  %s8 = ssub.s32 1, %s6
  %s9 = scalar_select 0, %s8, %s6
  $region1: #{tpu_custom_call.1} parent=0
    #allocation2 [shape = 'u8[393216]{0}', space=vmem, size = 0x60000, scoped, tag = 'input window, operand 0']
    #allocation3 [shape = 's32[2]{0}', space=sflag, size = 0x8, scoped, tag = 'scoped memory for tpu_custom_call.1']
    #allocation4 [shape = 's32[2]{0}', space=sflag, size = 0x8, scoped, tag = 'scoped memory for tpu_custom_call.1']
    #allocation5 [shape = 'u8[294912]{0}', space=vmem, size = 0x48000, scoped, tag = 'input window, operand 1, single buffered']
    #allocation6 [shape = 's32[1]{0}', space=sflag, size = 0x4, scoped, tag = 'scoped memory for tpu_custom_call.1']
    #allocation7 [shape = 'u8[131072]{0}', space=vmem, size = 0x20000, scoped, tag = 'output window, operand 0']
    #allocation8 [shape = 'u8[131072]{0}', space=vmem, size = 0x20000, scoped, tag = 'output window, operand 1']
    #allocation9 [shape = 's32[2]{0}', space=sflag, size = 0x8, scoped, tag = 'scoped memory for tpu_custom_call.1']
    #allocation10 [shape = 'u8[131072]{0}', space=vmem, size = 0x20000, scoped, tag = 'output window, operand 2']
    %10 = vsyncpa [#allocation3], 0
    %s11 = scalar_lea.sflag [#allocation3], 1
    %12 = vsyncpa %s11, 0
    %13 = vsyncpa [#allocation6], 0
    %14 = vsyncpa [#allocation4], 0
    %s15 = scalar_lea.sflag [#allocation4], 1
    %16 = vsyncpa %s15, 0
    %17 = vsyncpa [#allocation9], 0
    %s18 = scalar_lea.sflag [#allocation9], 1
    %19 = vsyncpa %s18, 0
    loop: start=0, step=1, limit=4
    $region2: #{tpu_custom_call.1} parent=1 // loop_pre_header
      _
    $region3: #{tpu_custom_call.1} parent=1 // loop_header
      %s21 = sphi 0, %s25
      %p22 = scmp.ge.s32.totalorder %s21, 4
      %s28 = sphi 0, %s40
      %s29 = sphi 0, %s36
      %s30 = sphi 0, %s28
      %s31 = sphi 0, %s29
      %s32 = sphi 0, %s30
      %s33 = sphi 0, %s31
      %s45 = sphi 0, %s47
      %s48 = sphi 0, %s45
      %s49 = sphi 0, %s48
      %s65 = sphi 0, %s49
      %s69 = sphi 0, %s69
      %s71 = sphi 0, %s69
      %s72 = sphi 0, %s71
      %s86 = sphi 0, %s72
      %s94 = sphi 0, %s96
      %s97 = sphi 0, %s94
      %s98 = sphi 0, %s97
      %s114 = sphi 0, %s98
      %s122 = sphi 0, %s124
      %s125 = sphi 0, %s122
      %s126 = sphi 0, %s125
      %s142 = sphi 0, %s126
      %s150 = sphi 0, %s152
      %s153 = sphi 0, %s150
      %s154 = sphi 0, %s153
      %s170 = sphi 0, %s154
    $region4: #{tpu_custom_call.1} parent=1 // loop_header_branch
      %24 = sbr.rel (%p22) target = $region8
    $region5: #{tpu_custom_call.1} parent=1 // loop_body
      %s26 = ssub.s32 %s21, 1
      %s27 = ssub.s32 %s21, 2
      %s34 = sadd.s32 1, %s29
      %p35 = scmp.ge.s32.totalorder %s34, 1
      %s36 = scalar_select %p35, 0, %s34
      %s37 = sadd.s32 1, %s28
      %s38 = scalar_select %p35, %s37, %s28
      %p39 = scmp.ge.s32.totalorder %s38, 2
      %s40 = scalar_select %p39, 0, %s38
      %s41 = ssub.s32 %s28, %s40
      %s42 = ssub.s32 %s29, %s36
      %s43 = sor.u32 %s41, %s42
      %p44 = scmp.eq.s32.totalorder %s43, 0
      %s46 = sadd.s32 %s45, 1
      %s47 = scalar_select %p44, %s45, %s46
      %p50 = pneg %p44
      %p51 = scmp.eq.s32.totalorder %s21, 1
      %p52 = por %p50, %p51
      %p53 = scmp.ne.s32.totalorder %s45, %s48
      %p54 = scmp.eq.s32.totalorder %s21, 0
      %p55 = por %p53, %p54
      %p56 = scmp.ne.s32.totalorder %s45, %s48
      %p57 = scmp.eq.s32.totalorder %s26, 1
      %p58 = por %p56, %p57
      %p59 = scmp.ne.s32.totalorder %s48, %s49
      %p60 = scmp.eq.s32.totalorder %s26, 0
      %p61 = por %p59, %p60
      %p62 = scmp.ne.s32.totalorder %s48, %s49
      %p63 = scmp.eq.s32.totalorder %s27, 1
      %p64 = por %p62, %p63
      %p66 = scmp.ne.s32.totalorder %s49, %s65
      %p67 = scmp.eq.s32.totalorder %s27, 0
      %p68 = por %p66, %p67
      %s70 = sadd.s32 %s69, 1
      %p73 = scmp.eq.s32.totalorder %s21, 1
      %p74 = scmp.ne.s32.totalorder %s69, %s71
      %p75 = scmp.eq.s32.totalorder %s21, 0
      %p76 = por %p74, %p75
      %p77 = scmp.ne.s32.totalorder %s69, %s71
      %p78 = scmp.eq.s32.totalorder %s26, 1
      %p79 = por %p77, %p78
      %p80 = scmp.ne.s32.totalorder %s71, %s72
      %p81 = scmp.eq.s32.totalorder %s26, 0
      %p82 = por %p80, %p81
      %p83 = scmp.ne.s32.totalorder %s71, %s72
      %p84 = scmp.eq.s32.totalorder %s27, 1
      %p85 = por %p83, %p84
      %p87 = scmp.ne.s32.totalorder %s72, %s86
      %p88 = scmp.eq.s32.totalorder %s27, 0
      %p89 = por %p87, %p88
      %s90 = ssub.s32 %s28, %s40
      %s91 = ssub.s32 %s29, %s36
      %s92 = sor.u32 %s90, %s91
      %p93 = scmp.eq.s32.totalorder %s92, 0
      %s95 = sadd.s32 %s94, 1
      %s96 = scalar_select %p93, %s94, %s95
      %p99 = pneg %p93
      %p100 = scmp.eq.s32.totalorder %s21, 1
      %p101 = por %p99, %p100
      %p102 = scmp.ne.s32.totalorder %s94, %s97
      %p103 = scmp.eq.s32.totalorder %s21, 0
      %p104 = por %p102, %p103
      %p105 = scmp.ne.s32.totalorder %s94, %s97
      %p106 = scmp.eq.s32.totalorder %s26, 1
      %p107 = por %p105, %p106
      %p108 = scmp.ne.s32.totalorder %s97, %s98
      %p109 = scmp.eq.s32.totalorder %s26, 0
      %p110 = por %p108, %p109
      %p111 = scmp.ne.s32.totalorder %s97, %s98
      %p112 = scmp.eq.s32.totalorder %s27, 1
      %p113 = por %p111, %p112
      %p115 = scmp.ne.s32.totalorder %s98, %s114
      %p116 = scmp.eq.s32.totalorder %s27, 0
      %p117 = por %p115, %p116
      %s118 = ssub.s32 %s28, %s40
      %s119 = ssub.s32 %s29, %s36
      %s120 = sor.u32 %s118, %s119
      %p121 = scmp.eq.s32.totalorder %s120, 0
      %s123 = sadd.s32 %s122, 1
      %s124 = scalar_select %p121, %s122, %s123
      %p127 = pneg %p121
      %p128 = scmp.eq.s32.totalorder %s21, 1
      %p129 = por %p127, %p128
      %p130 = scmp.ne.s32.totalorder %s122, %s125
      %p131 = scmp.eq.s32.totalorder %s21, 0
      %p132 = por %p130, %p131
      %p133 = scmp.ne.s32.totalorder %s122, %s125
      %p134 = scmp.eq.s32.totalorder %s26, 1
      %p135 = por %p133, %p134
      %p136 = scmp.ne.s32.totalorder %s125, %s126
      %p137 = scmp.eq.s32.totalorder %s26, 0
      %p138 = por %p136, %p137
      %p139 = scmp.ne.s32.totalorder %s125, %s126
      %p140 = scmp.eq.s32.totalorder %s27, 1
      %p141 = por %p139, %p140
      %p143 = scmp.ne.s32.totalorder %s126, %s142
      %p144 = scmp.eq.s32.totalorder %s27, 0
      %p145 = por %p143, %p144
      %s146 = ssub.s32 %s28, %s40
      %s147 = ssub.s32 %s29, %s36
      %s148 = sor.u32 %s146, %s147
      %p149 = scmp.eq.s32.totalorder %s148, 0
      %s151 = sadd.s32 %s150, 1
      %s152 = scalar_select %p149, %s150, %s151
      %p155 = pneg %p149
      %p156 = scmp.eq.s32.totalorder %s21, 1
      %p157 = por %p155, %p156
      %p158 = scmp.ne.s32.totalorder %s150, %s153
      %p159 = scmp.eq.s32.totalorder %s21, 0
      %p160 = por %p158, %p159
      %p161 = scmp.ne.s32.totalorder %s150, %s153
      %p162 = scmp.eq.s32.totalorder %s26, 1
      %p163 = por %p161, %p162
      %p164 = scmp.ne.s32.totalorder %s153, %s154
      %p165 = scmp.eq.s32.totalorder %s26, 0
      %p166 = por %p164, %p165
      %p167 = scmp.ne.s32.totalorder %s153, %s154
      %p168 = scmp.eq.s32.totalorder %s27, 1
      %p169 = por %p167, %p168
      %p171 = scmp.ne.s32.totalorder %s154, %s170
      %p172 = scmp.eq.s32.totalorder %s27, 0
      %p173 = por %p171, %p172
      %p174 = scmp.le.s32.totalorder 1, %s21
      %p175 = scmp.lt.s32.totalorder %s21, 3
      %p176 = pnand %p174, %p175
      %p177 = pneg %p176
      // Predicated region
      $region9: #{tpu_custom_call.1} parent=5 // pred_check
        _
      $region10: #{tpu_custom_call.1} parent=5 // pred_check_branch
        %179 = sbr.rel (%p176) target = $region12
      $region11: #{tpu_custom_call.1} parent=5 // pred_region
        %s180 = ssub.s32 %s21, 1
        // Predicated region
        $region13: #{tpu_custom_call.1} parent=11 // pred_check
          %p181 = pneg %p82
        $region14: #{tpu_custom_call.1} parent=11 // pred_check_branch
          %183 = sbr.rel (%p181) target = $region16
        $region15: #{tpu_custom_call.1} parent=11 // pred_region
          %185 = vsyncadd [#allocation6], 0
          %s186 = sshll.u32 %s1, 4
          %s187 = int_to_ptr.hbm [resolvable:$true] %s186
          %s188 = sshll.u32 [#allocation5], 4
          %s189 = int_to_ptr.vmem [resolvable:$true] %s188
          %194 = dma.hbm_to_vmem [thread:$0]  %s187, 9216, %s189, [#allocation6], 192, 192, 12
        $region16: #{tpu_custom_call.1} parent=11 // pred_fallthru
          _
      $region12: #{tpu_custom_call.1} parent=5 // pred_fallthru
        _
      %p195 = scmp.lt.s32.totalorder %s21, 2
      // Predicated region
      $region17: #{tpu_custom_call.1} parent=5 // pred_check
        %p196 = pneg %p195
      $region18: #{tpu_custom_call.1} parent=5 // pred_check_branch
        %198 = sbr.rel (%p196) target = $region20
      $region19: #{tpu_custom_call.1} parent=5 // pred_region
        // Predicated region
        $region21: #{tpu_custom_call.1} parent=19 // pred_check
          %p199 = pneg %p55
        $region22: #{tpu_custom_call.1} parent=19 // pred_check_branch
          %201 = sbr.rel (%p199) target = $region24
        $region23: #{tpu_custom_call.1} parent=19 // pred_region
          %s202 = sand.u32 %s45, 1
          %s203 = scalar_lea.sflag [#allocation3], %s202
          %s204 = sand.u32 %s45, 1
          %s205 = smul.addr %s204, 384
          %s206 = scalar_lea.vmem [#allocation2], %s205
          %s207 = smul.u32 32, %s29
          %209 = vsyncadd %s203, 0
          %s210 = smul.addr %s207, 3
          %s211 = smul.addr %s28, 96
          %s212 = sadd.s32 %s210, %s211
          %s213 = smul.addr %s212, 4
          %s214 = scalar_lea.hbm %s0, %s213
          %s215 = sshll.u32 %s214, 4
          %s216 = int_to_ptr.hbm [resolvable:$true] %s215
          %s217 = sshll.u32 %s206, 4
          %s218 = int_to_ptr.vmem [resolvable:$true] %s217
          %223 = dma.hbm_to_vmem [thread:$0]  %s216, 6144, %s218, %s203, 192, 192, 12
        $region24: #{tpu_custom_call.1} parent=19 // pred_fallthru
          _
      $region20: #{tpu_custom_call.1} parent=5 // pred_fallthru
        _
      %p224 = scmp.le.s32.totalorder 1, %s21
      %p225 = scmp.lt.s32.totalorder %s21, 3
      %p226 = pnand %p224, %p225
      %p227 = pneg %p226
      // Predicated region
      $region25: #{tpu_custom_call.1} parent=5 // pred_check
        _
      $region26: #{tpu_custom_call.1} parent=5 // pred_check_branch
        %229 = sbr.rel (%p226) target = $region28
      $region27: #{tpu_custom_call.1} parent=5 // pred_region
        %s230 = ssub.s32 %s21, 1
        %s231 = sand.u32 %s48, 1
        %s232 = scalar_lea.sflag [#allocation3], %s231
        %s233 = sand.u32 %s48, 1
        %s234 = smul.addr %s233, 384
        %s235 = scalar_lea.vmem [#allocation2], %s234
        // Predicated region
        $region29: #{tpu_custom_call.1} parent=27 // pred_check
          %p236 = pneg %p61
        $region30: #{tpu_custom_call.1} parent=27 // pred_check_branch
          %238 = sbr.rel (%p236) target = $region32
        $region31: #{tpu_custom_call.1} parent=27 // pred_region
          %240 = dma.done %s232, 6144
        $region32: #{tpu_custom_call.1} parent=27 // pred_fallthru
          _
        // Predicated region
        $region33: #{tpu_custom_call.1} parent=27 // pred_check
          %p241 = pneg %p82
        $region34: #{tpu_custom_call.1} parent=27 // pred_check_branch
          %243 = sbr.rel (%p241) target = $region36
        $region35: #{tpu_custom_call.1} parent=27 // pred_region
          %245 = dma.done [#allocation6], 9216
        $region36: #{tpu_custom_call.1} parent=27 // pred_fallthru
          _
        %s246 = sand.u32 %s48, 1
        %s247 = scalar_lea.sflag [#allocation3], %s246
        %s248 = sand.u32 %s48, 1
        %s249 = smul.addr %s248, 384
        %s250 = scalar_lea.vmem [#allocation2], %s249
        %p251 = pneg %p61
        %p252 = pneg %p58
        %p253 = pneg %p82
        %p254 = pneg %p79
        %p255 = pneg %p110
        %p256 = pneg %p107
        %s257 = sand.u32 %s97, 1
        %s258 = scalar_lea.sflag [#allocation4], %s257
        %s259 = sand.u32 %s97, 1
        %s260 = smul.addr %s259, 128
        %s261 = scalar_lea.vmem [#allocation7], %s260
        %p262 = pneg %p138
        %p263 = pneg %p135
        %s264 = sand.u32 %s26, 1
        %s265 = scalar_lea.sflag [#allocation9], %s264
        %s266 = sand.u32 %s125, 1
        %s267 = smul.addr %s266, 128
        %s268 = scalar_lea.vmem [#allocation8], %s267
        %p269 = pneg %p166
        %p270 = pneg %p163
        %s271 = sand.u32 %s26, 1
        %s272 = scalar_lea.sflag [#allocation9], %s271
        %s273 = sand.u32 %s153, 1
        %s274 = smul.addr %s273, 128
        %s275 = scalar_lea.vmem [#allocation10], %s274
        %s276 = smul.u32 32, %s31
        %s277 = smul.u32 32, %s31
        %s278 = smul.u32 32, %s31
        %s279 = smul.u32 32, %s31
        %v280 = vld [vmem:[%s235] sm:$0xff]
        %v281 = vld [vmem:[%s235 + $0x8] sm:$0xf]
        %v282 = vld [vmem:[%s235 + $0xc] sm:$0xff]
        %v283 = vld [vmem:[%s235 + $0x14] sm:$0xf]
        %v284 = vld [vmem:[%s235 + $0x18] sm:$0xff]
        %v285 = vld [vmem:[%s235 + $0x20] sm:$0xf]
        %v286 = vld [vmem:[%s235 + $0x24] sm:$0xff]
        %v287 = vld [vmem:[%s235 + $0x2c] sm:$0xf]
        %v288 = vld [vmem:[%s235 + $0x30] sm:$0xff]
        %v289 = vld [vmem:[%s235 + $0x38] sm:$0xf]
        %v290 = vld [vmem:[%s235 + $0x3c] sm:$0xff]
        %v291 = vld [vmem:[%s235 + $0x44] sm:$0xf]
        %v292 = vld [vmem:[%s235 + $0x48] sm:$0xff]
        %v293 = vld [vmem:[%s235 + $0x50] sm:$0xf]
        %v294 = vld [vmem:[%s235 + $0x54] sm:$0xff]
        %v295 = vld [vmem:[%s235 + $0x5c] sm:$0xf]
        %v296 = vld [vmem:[%s235 + $0x60] sm:$0xff]
        %v297 = vld [vmem:[%s235 + $0x68] sm:$0xf]
        %v298 = vld [vmem:[%s235 + $0x6c] sm:$0xff]
        %v299 = vld [vmem:[%s235 + $0x74] sm:$0xf]
        %v300 = vld [vmem:[%s235 + $0x78] sm:$0xff]
        %v301 = vld [vmem:[%s235 + $0x80] sm:$0xf]
        %v302 = vld [vmem:[%s235 + $0x84] sm:$0xff]
        %v303 = vld [vmem:[%s235 + $0x8c] sm:$0xf]
        %v304 = vld [vmem:[%s235 + $0x90] sm:$0xff]
        %v305 = vld [vmem:[%s235 + $0x98] sm:$0xf]
        %v306 = vld [vmem:[%s235 + $0x9c] sm:$0xff]
        %v307 = vld [vmem:[%s235 + $0xa4] sm:$0xf]
        %v308 = vld [vmem:[%s235 + $0xa8] sm:$0xff]
        %v309 = vld [vmem:[%s235 + $0xb0] sm:$0xf]
        %v310 = vld [vmem:[%s235 + $0xb4] sm:$0xff]
        %v311 = vld [vmem:[%s235 + $0xbc] sm:$0xf]
        %v312 = vld [vmem:[%s235 + $0xc0] sm:$0xff]
        %v313 = vld [vmem:[%s235 + $0xc8] sm:$0xf]
        %v314 = vld [vmem:[%s235 + $0xcc] sm:$0xff]
        %v315 = vld [vmem:[%s235 + $0xd4] sm:$0xf]
        %v316 = vld [vmem:[%s235 + $0xd8] sm:$0xff]
        %v317 = vld [vmem:[%s235 + $0xe0] sm:$0xf]
        %v318 = vld [vmem:[%s235 + $0xe4] sm:$0xff]
        %v319 = vld [vmem:[%s235 + $0xec] sm:$0xf]
        %v320 = vld [vmem:[%s235 + $0xf0] sm:$0xff]
        %v321 = vld [vmem:[%s235 + $0xf8] sm:$0xf]
        %v322 = vld [vmem:[%s235 + $0xfc] sm:$0xff]
        %v323 = vld [vmem:[%s235 + $0x104] sm:$0xf]
        %v324 = vld [vmem:[%s235 + $0x108] sm:$0xff]
        %v325 = vld [vmem:[%s235 + $0x110] sm:$0xf]
        %v326 = vld [vmem:[%s235 + $0x114] sm:$0xff]
        %v327 = vld [vmem:[%s235 + $0x11c] sm:$0xf]
        %v328 = vld [vmem:[%s235 + $0x120] sm:$0xff]
        %v329 = vld [vmem:[%s235 + $0x128] sm:$0xf]
        %v330 = vld [vmem:[%s235 + $0x12c] sm:$0xff]
        %v331 = vld [vmem:[%s235 + $0x134] sm:$0xf]
        %v332 = vld [vmem:[%s235 + $0x138] sm:$0xff]
        %v333 = vld [vmem:[%s235 + $0x140] sm:$0xf]
        %v334 = vld [vmem:[%s235 + $0x144] sm:$0xff]
        %v335 = vld [vmem:[%s235 + $0x14c] sm:$0xf]
        %v336 = vld [vmem:[%s235 + $0x150] sm:$0xff]
        %v337 = vld [vmem:[%s235 + $0x158] sm:$0xf]
        %v338 = vld [vmem:[%s235 + $0x15c] sm:$0xff]
        %v339 = vld [vmem:[%s235 + $0x164] sm:$0xf]
        %v340 = vld [vmem:[%s235 + $0x168] sm:$0xff]
        %v341 = vld [vmem:[%s235 + $0x170] sm:$0xf]
        %v342 = vld [vmem:[%s235 + $0x174] sm:$0xff]
        %v343 = vld [vmem:[%s235 + $0x17c] sm:$0xf]
        %v344 = vld [vmem:[#allocation5] sm:$0xff]
        %v345 = vld [vmem:[#allocation5 + $0x8] sm:$0xf]
        %v346 = vld [vmem:[#allocation5 + $0xc] sm:$0xff]
        %v347 = vld [vmem:[#allocation5 + $0x14] sm:$0xf]
        %v348 = vld [vmem:[#allocation5 + $0x18] sm:$0xff]
        %v349 = vld [vmem:[#allocation5 + $0x20] sm:$0xf]
        %v350 = vld [vmem:[#allocation5 + $0x24] sm:$0xff]
        %v351 = vld [vmem:[#allocation5 + $0x2c] sm:$0xf]
        %v352 = vld [vmem:[#allocation5 + $0x30] sm:$0xff]
        %v353 = vld [vmem:[#allocation5 + $0x38] sm:$0xf]
        %v354 = vld [vmem:[#allocation5 + $0x3c] sm:$0xff]
        %v355 = vld [vmem:[#allocation5 + $0x44] sm:$0xf]
        %v356 = vld [vmem:[#allocation5 + $0x48] sm:$0xff]
        %v357 = vld [vmem:[#allocation5 + $0x50] sm:$0xf]
        %v358 = vld [vmem:[#allocation5 + $0x54] sm:$0xff]
        %v359 = vld [vmem:[#allocation5 + $0x5c] sm:$0xf]
        %v360 = vld [vmem:[#allocation5 + $0x60] sm:$0xff]
        %v361 = vld [vmem:[#allocation5 + $0x68] sm:$0xf]
        %v362 = vld [vmem:[#allocation5 + $0x6c] sm:$0xff]
        %v363 = vld [vmem:[#allocation5 + $0x74] sm:$0xf]
        %v364 = vld [vmem:[#allocation5 + $0x78] sm:$0xff]
        %v365 = vld [vmem:[#allocation5 + $0x80] sm:$0xf]
        %v366 = vld [vmem:[#allocation5 + $0x84] sm:$0xff]
        %v367 = vld [vmem:[#allocation5 + $0x8c] sm:$0xf]
        %v368 = vld [vmem:[#allocation5 + $0x90] sm:$0xff]
        %v369 = vld [vmem:[#allocation5 + $0x98] sm:$0xf]
        %v370 = vld [vmem:[#allocation5 + $0x9c] sm:$0xff]
        %v371 = vld [vmem:[#allocation5 + $0xa4] sm:$0xf]
        %v372 = vld [vmem:[#allocation5 + $0xa8] sm:$0xff]
        %v373 = vld [vmem:[#allocation5 + $0xb0] sm:$0xf]
        %v374 = vld [vmem:[#allocation5 + $0xb4] sm:$0xff]
        %v375 = vld [vmem:[#allocation5 + $0xbc] sm:$0xf]
        %v376 = vld [vmem:[#allocation5 + $0xc0] sm:$0xff]
        %v377 = vld [vmem:[#allocation5 + $0xc8] sm:$0xf]
        %v378 = vld [vmem:[#allocation5 + $0xcc] sm:$0xff]
        %v379 = vld [vmem:[#allocation5 + $0xd4] sm:$0xf]
        %v380 = vld [vmem:[#allocation5 + $0xd8] sm:$0xff]
        %v381 = vld [vmem:[#allocation5 + $0xe0] sm:$0xf]
        %v382 = vld [vmem:[#allocation5 + $0xe4] sm:$0xff]
        %v383 = vld [vmem:[#allocation5 + $0xec] sm:$0xf]
        %v384 = vld [vmem:[#allocation5 + $0xf0] sm:$0xff]
        %v385 = vld [vmem:[#allocation5 + $0xf8] sm:$0xf]
        %v386 = vld [vmem:[#allocation5 + $0xfc] sm:$0xff]
        %v387 = vld [vmem:[#allocation5 + $0x104] sm:$0xf]
        %v388 = vld [vmem:[#allocation5 + $0x108] sm:$0xff]
        %v389 = vld [vmem:[#allocation5 + $0x110] sm:$0xf]
        %v390 = vld [vmem:[#allocation5 + $0x114] sm:$0xff]
        %v391 = vld [vmem:[#allocation5 + $0x11c] sm:$0xf]
        %v392 = vld [vmem:[#allocation5 + $0x120] sm:$0xff]
        %v393 = vld [vmem:[#allocation5 + $0x128] sm:$0xf]
        %v394 = vld [vmem:[#allocation5 + $0x12c] sm:$0xff]
        %v395 = vld [vmem:[#allocation5 + $0x134] sm:$0xf]
        %v396 = vld [vmem:[#allocation5 + $0x138] sm:$0xff]
        %v397 = vld [vmem:[#allocation5 + $0x140] sm:$0xf]
        %v398 = vld [vmem:[#allocation5 + $0x144] sm:$0xff]
        %v399 = vld [vmem:[#allocation5 + $0x14c] sm:$0xf]
        %v400 = vld [vmem:[#allocation5 + $0x150] sm:$0xff]
        %v401 = vld [vmem:[#allocation5 + $0x158] sm:$0xf]
        %v402 = vld [vmem:[#allocation5 + $0x15c] sm:$0xff]
        %v403 = vld [vmem:[#allocation5 + $0x164] sm:$0xf]
        %v404 = vld [vmem:[#allocation5 + $0x168] sm:$0xff]
        %v405 = vld [vmem:[#allocation5 + $0x170] sm:$0xf]
        %v406 = vld [vmem:[#allocation5 + $0x174] sm:$0xff]
        %v407 = vld [vmem:[#allocation5 + $0x17c] sm:$0xf]
        %v408 = vld [vmem:[#allocation5 + $0x180] sm:$0xff]
        %v409 = vld [vmem:[#allocation5 + $0x188] sm:$0xf]
        %v410 = vld [vmem:[#allocation5 + $0x18c] sm:$0xff]
        %v411 = vld [vmem:[#allocation5 + $0x194] sm:$0xf]
        %v412 = vld [vmem:[#allocation5 + $0x198] sm:$0xff]
        %v413 = vld [vmem:[#allocation5 + $0x1a0] sm:$0xf]
        %v414 = vld [vmem:[#allocation5 + $0x1a4] sm:$0xff]
        %v415 = vld [vmem:[#allocation5 + $0x1ac] sm:$0xf]
        %v416 = vld [vmem:[#allocation5 + $0x1b0] sm:$0xff]
        %v417 = vld [vmem:[#allocation5 + $0x1b8] sm:$0xf]
        %v418 = vld [vmem:[#allocation5 + $0x1bc] sm:$0xff]
        %v419 = vld [vmem:[#allocation5 + $0x1c4] sm:$0xf]
        %v420 = vld [vmem:[#allocation5 + $0x1c8] sm:$0xff]
        %v421 = vld [vmem:[#allocation5 + $0x1d0] sm:$0xf]
        %v422 = vld [vmem:[#allocation5 + $0x1d4] sm:$0xff]
        %v423 = vld [vmem:[#allocation5 + $0x1dc] sm:$0xf]
        %v424 = vld [vmem:[#allocation5 + $0x1e0] sm:$0xff]
        %v425 = vld [vmem:[#allocation5 + $0x1e8] sm:$0xf]
        %v426 = vld [vmem:[#allocation5 + $0x1ec] sm:$0xff]
        %v427 = vld [vmem:[#allocation5 + $0x1f4] sm:$0xf]
        %v428 = vld [vmem:[#allocation5 + $0x1f8] sm:$0xff]
        %v429 = vld [vmem:[#allocation5 + $0x200] sm:$0xf]
        %v430 = vld [vmem:[#allocation5 + $0x204] sm:$0xff]
        %v431 = vld [vmem:[#allocation5 + $0x20c] sm:$0xf]
        %v432 = vld [vmem:[#allocation5 + $0x210] sm:$0xff]
        %v433 = vld [vmem:[#allocation5 + $0x218] sm:$0xf]
        %v434 = vld [vmem:[#allocation5 + $0x21c] sm:$0xff]
        %v435 = vld [vmem:[#allocation5 + $0x224] sm:$0xf]
        %v436 = vld [vmem:[#allocation5 + $0x228] sm:$0xff]
        %v437 = vld [vmem:[#allocation5 + $0x230] sm:$0xf]
        %v438 = vld [vmem:[#allocation5 + $0x234] sm:$0xff]
        %v439 = vld [vmem:[#allocation5 + $0x23c] sm:$0xf]
        %v504 = vunpack.c.l.b16 %v280
        %v505 = vunpack.c.h.b16 %v280
        %v506 = vunpack.c.l.b16 %v281
        %v507 = vunpack.c.l.b16 %v282
        %v508 = vunpack.c.h.b16 %v282
        %v509 = vunpack.c.l.b16 %v283
        %v510 = vunpack.c.l.b16 %v284
        %v511 = vunpack.c.h.b16 %v284
        %v512 = vunpack.c.l.b16 %v285
        %v513 = vunpack.c.l.b16 %v286
        %v514 = vunpack.c.h.b16 %v286
        %v515 = vunpack.c.l.b16 %v287
        %v516 = vunpack.c.l.b16 %v288
        %v517 = vunpack.c.h.b16 %v288
        %v518 = vunpack.c.l.b16 %v289
        %v519 = vunpack.c.l.b16 %v290
        %v520 = vunpack.c.h.b16 %v290
        %v521 = vunpack.c.l.b16 %v291
        %v522 = vunpack.c.l.b16 %v292
        %v523 = vunpack.c.h.b16 %v292
        %v524 = vunpack.c.l.b16 %v293
        %v525 = vunpack.c.l.b16 %v294
        %v526 = vunpack.c.h.b16 %v294
        %v527 = vunpack.c.l.b16 %v295
        %v528 = vunpack.c.l.b16 %v296
        %v529 = vunpack.c.h.b16 %v296
        %v530 = vunpack.c.l.b16 %v297
        %v531 = vunpack.c.l.b16 %v298
        %v532 = vunpack.c.h.b16 %v298
        %v533 = vunpack.c.l.b16 %v299
        %v534 = vunpack.c.l.b16 %v300
        %v535 = vunpack.c.h.b16 %v300
        %v536 = vunpack.c.l.b16 %v301
        %v537 = vunpack.c.l.b16 %v302
        %v538 = vunpack.c.h.b16 %v302
        %v539 = vunpack.c.l.b16 %v303
        %v540 = vunpack.c.l.b16 %v304
        %v541 = vunpack.c.h.b16 %v304
        %v542 = vunpack.c.l.b16 %v305
        %v543 = vunpack.c.l.b16 %v306
        %v544 = vunpack.c.h.b16 %v306
        %v545 = vunpack.c.l.b16 %v307
        %v546 = vunpack.c.l.b16 %v308
        %v547 = vunpack.c.h.b16 %v308
        %v548 = vunpack.c.l.b16 %v309
        %v549 = vunpack.c.l.b16 %v310
        %v550 = vunpack.c.h.b16 %v310
        %v551 = vunpack.c.l.b16 %v311
        %v552 = vunpack.c.l.b16 %v312
        %v553 = vunpack.c.h.b16 %v312
        %v554 = vunpack.c.l.b16 %v313
        %v555 = vunpack.c.l.b16 %v314
        %v556 = vunpack.c.h.b16 %v314
        %v557 = vunpack.c.l.b16 %v315
        %v558 = vunpack.c.l.b16 %v316
        %v559 = vunpack.c.h.b16 %v316
        %v560 = vunpack.c.l.b16 %v317
        %v561 = vunpack.c.l.b16 %v318
        %v562 = vunpack.c.h.b16 %v318
        %v563 = vunpack.c.l.b16 %v319
        %v564 = vunpack.c.l.b16 %v320
        %v565 = vunpack.c.h.b16 %v320
        %v566 = vunpack.c.l.b16 %v321
        %v567 = vunpack.c.l.b16 %v322
        %v568 = vunpack.c.h.b16 %v322
        %v569 = vunpack.c.l.b16 %v323
        %v570 = vunpack.c.l.b16 %v324
        %v571 = vunpack.c.h.b16 %v324
        %v572 = vunpack.c.l.b16 %v325
        %v573 = vunpack.c.l.b16 %v326
        %v574 = vunpack.c.h.b16 %v326
        %v575 = vunpack.c.l.b16 %v327
        %v576 = vunpack.c.l.b16 %v328
        %v577 = vunpack.c.h.b16 %v328
        %v578 = vunpack.c.l.b16 %v329
        %v579 = vunpack.c.l.b16 %v330
        %v580 = vunpack.c.h.b16 %v330
        %v581 = vunpack.c.l.b16 %v331
        %v582 = vunpack.c.l.b16 %v332
        %v583 = vunpack.c.h.b16 %v332
        %v584 = vunpack.c.l.b16 %v333
        %v585 = vunpack.c.l.b16 %v334
        %v586 = vunpack.c.h.b16 %v334
        %v587 = vunpack.c.l.b16 %v335
        %v588 = vunpack.c.l.b16 %v336
        %v589 = vunpack.c.h.b16 %v336
        %v590 = vunpack.c.l.b16 %v337
        %v591 = vunpack.c.l.b16 %v338
        %v592 = vunpack.c.h.b16 %v338
        %v593 = vunpack.c.l.b16 %v339
        %v594 = vunpack.c.l.b16 %v340
        %v595 = vunpack.c.h.b16 %v340
        %v596 = vunpack.c.l.b16 %v341
        %v597 = vunpack.c.l.b16 %v342
        %v598 = vunpack.c.h.b16 %v342
        %v599 = vunpack.c.l.b16 %v343
        %v600 = vpack.c.b16 %v507, %v504
        %v601 = vpack.c.b16 %v508, %v505
        %v602 = vpack.c.b16 %v509, %v506
        %v603 = vpack.c.b16 %v513, %v510
        %v604 = vpack.c.b16 %v514, %v511
        %v605 = vpack.c.b16 %v515, %v512
        %v606 = vpack.c.b16 %v519, %v516
        %v607 = vpack.c.b16 %v520, %v517
        %v608 = vpack.c.b16 %v521, %v518
        %v609 = vpack.c.b16 %v525, %v522
        %v610 = vpack.c.b16 %v526, %v523
        %v611 = vpack.c.b16 %v527, %v524
        %v612 = vpack.c.b16 %v531, %v528
        %v613 = vpack.c.b16 %v532, %v529
        %v614 = vpack.c.b16 %v533, %v530
        %v615 = vpack.c.b16 %v537, %v534
        %v616 = vpack.c.b16 %v538, %v535
        %v617 = vpack.c.b16 %v539, %v536
        %v618 = vpack.c.b16 %v543, %v540
        %v619 = vpack.c.b16 %v544, %v541
        %v620 = vpack.c.b16 %v545, %v542
        %v621 = vpack.c.b16 %v549, %v546
        %v622 = vpack.c.b16 %v550, %v547
        %v623 = vpack.c.b16 %v551, %v548
        %v624 = vpack.c.b16 %v555, %v552
        %v625 = vpack.c.b16 %v556, %v553
        %v626 = vpack.c.b16 %v557, %v554
        %v627 = vpack.c.b16 %v561, %v558
        %v628 = vpack.c.b16 %v562, %v559
        %v629 = vpack.c.b16 %v563, %v560
        %v630 = vpack.c.b16 %v567, %v564
        %v631 = vpack.c.b16 %v568, %v565
        %v632 = vpack.c.b16 %v569, %v566
        %v633 = vpack.c.b16 %v573, %v570
        %v634 = vpack.c.b16 %v574, %v571
        %v635 = vpack.c.b16 %v575, %v572
        %v636 = vpack.c.b16 %v579, %v576
        %v637 = vpack.c.b16 %v580, %v577
        %v638 = vpack.c.b16 %v581, %v578
        %v639 = vpack.c.b16 %v585, %v582
        %v640 = vpack.c.b16 %v586, %v583
        %v641 = vpack.c.b16 %v587, %v584
        %v642 = vpack.c.b16 %v591, %v588
        %v643 = vpack.c.b16 %v592, %v589
        %v644 = vpack.c.b16 %v593, %v590
        %v645 = vpack.c.b16 %v597, %v594
        %v646 = vpack.c.b16 %v598, %v595
        %v647 = vpack.c.b16 %v599, %v596
        %v792 = vunpack.c.l.b16 %v344
        %v793 = vunpack.c.h.b16 %v344
        %v794 = vunpack.c.l.b16 %v345
        %v795 = vunpack.c.l.b16 %v346
        %v796 = vunpack.c.h.b16 %v346
        %v797 = vunpack.c.l.b16 %v347
        %v798 = vunpack.c.l.b16 %v348
        %v799 = vunpack.c.h.b16 %v348
        %v800 = vunpack.c.l.b16 %v349
        %v801 = vunpack.c.l.b16 %v350
        %v802 = vunpack.c.h.b16 %v350
        %v803 = vunpack.c.l.b16 %v351
        %v804 = vunpack.c.l.b16 %v352
        %v805 = vunpack.c.h.b16 %v352
        %v806 = vunpack.c.l.b16 %v353
        %v807 = vunpack.c.l.b16 %v354
        %v808 = vunpack.c.h.b16 %v354
        %v809 = vunpack.c.l.b16 %v355
        %v810 = vunpack.c.l.b16 %v356
        %v811 = vunpack.c.h.b16 %v356
        %v812 = vunpack.c.l.b16 %v357
        %v813 = vunpack.c.l.b16 %v358
        %v814 = vunpack.c.h.b16 %v358
        %v815 = vunpack.c.l.b16 %v359
        %v816 = vunpack.c.l.b16 %v360
        %v817 = vunpack.c.h.b16 %v360
        %v818 = vunpack.c.l.b16 %v361
        %v819 = vunpack.c.l.b16 %v362
        %v820 = vunpack.c.h.b16 %v362
        %v821 = vunpack.c.l.b16 %v363
        %v822 = vunpack.c.l.b16 %v364
        %v823 = vunpack.c.h.b16 %v364
        %v824 = vunpack.c.l.b16 %v365
        %v825 = vunpack.c.l.b16 %v366
        %v826 = vunpack.c.h.b16 %v366
        %v827 = vunpack.c.l.b16 %v367
        %v828 = vunpack.c.l.b16 %v368
        %v829 = vunpack.c.h.b16 %v368
        %v830 = vunpack.c.l.b16 %v369
        %v831 = vunpack.c.l.b16 %v370
        %v832 = vunpack.c.h.b16 %v370
        %v833 = vunpack.c.l.b16 %v371
        %v834 = vunpack.c.l.b16 %v372
        %v835 = vunpack.c.h.b16 %v372
        %v836 = vunpack.c.l.b16 %v373
        %v837 = vunpack.c.l.b16 %v374
        %v838 = vunpack.c.h.b16 %v374
        %v839 = vunpack.c.l.b16 %v375
        %v840 = vunpack.c.l.b16 %v376
        %v841 = vunpack.c.h.b16 %v376
        %v842 = vunpack.c.l.b16 %v377
        %v843 = vunpack.c.l.b16 %v378
        %v844 = vunpack.c.h.b16 %v378
        %v845 = vunpack.c.l.b16 %v379
        %v846 = vunpack.c.l.b16 %v380
        %v847 = vunpack.c.h.b16 %v380
        %v848 = vunpack.c.l.b16 %v381
        %v849 = vunpack.c.l.b16 %v382
        %v850 = vunpack.c.h.b16 %v382
        %v851 = vunpack.c.l.b16 %v383
        %v852 = vunpack.c.l.b16 %v384
        %v853 = vunpack.c.h.b16 %v384
        %v854 = vunpack.c.l.b16 %v385
        %v855 = vunpack.c.l.b16 %v386
        %v856 = vunpack.c.h.b16 %v386
        %v857 = vunpack.c.l.b16 %v387
        %v858 = vunpack.c.l.b16 %v388
        %v859 = vunpack.c.h.b16 %v388
        %v860 = vunpack.c.l.b16 %v389
        %v861 = vunpack.c.l.b16 %v390
        %v862 = vunpack.c.h.b16 %v390
        %v863 = vunpack.c.l.b16 %v391
        %v864 = vunpack.c.l.b16 %v392
        %v865 = vunpack.c.h.b16 %v392
        %v866 = vunpack.c.l.b16 %v393
        %v867 = vunpack.c.l.b16 %v394
        %v868 = vunpack.c.h.b16 %v394
        %v869 = vunpack.c.l.b16 %v395
        %v870 = vunpack.c.l.b16 %v396
        %v871 = vunpack.c.h.b16 %v396
        %v872 = vunpack.c.l.b16 %v397
        %v873 = vunpack.c.l.b16 %v398
        %v874 = vunpack.c.h.b16 %v398
        %v875 = vunpack.c.l.b16 %v399
        %v876 = vunpack.c.l.b16 %v400
        %v877 = vunpack.c.h.b16 %v400
        %v878 = vunpack.c.l.b16 %v401
        %v879 = vunpack.c.l.b16 %v402
        %v880 = vunpack.c.h.b16 %v402
        %v881 = vunpack.c.l.b16 %v403
        %v882 = vunpack.c.l.b16 %v404
        %v883 = vunpack.c.h.b16 %v404
        %v884 = vunpack.c.l.b16 %v405
        %v885 = vunpack.c.l.b16 %v406
        %v886 = vunpack.c.h.b16 %v406
        %v887 = vunpack.c.l.b16 %v407
        %v888 = vunpack.c.l.b16 %v408
        %v889 = vunpack.c.h.b16 %v408
        %v890 = vunpack.c.l.b16 %v409
        %v891 = vunpack.c.l.b16 %v410
        %v892 = vunpack.c.h.b16 %v410
        %v893 = vunpack.c.l.b16 %v411
        %v894 = vunpack.c.l.b16 %v412
        %v895 = vunpack.c.h.b16 %v412
        %v896 = vunpack.c.l.b16 %v413
        %v897 = vunpack.c.l.b16 %v414
        %v898 = vunpack.c.h.b16 %v414
        %v899 = vunpack.c.l.b16 %v415
        %v900 = vunpack.c.l.b16 %v416
        %v901 = vunpack.c.h.b16 %v416
        %v902 = vunpack.c.l.b16 %v417
        %v903 = vunpack.c.l.b16 %v418
        %v904 = vunpack.c.h.b16 %v418
        %v905 = vunpack.c.l.b16 %v419
        %v906 = vunpack.c.l.b16 %v420
        %v907 = vunpack.c.h.b16 %v420
        %v908 = vunpack.c.l.b16 %v421
        %v909 = vunpack.c.l.b16 %v422
        %v910 = vunpack.c.h.b16 %v422
        %v911 = vunpack.c.l.b16 %v423
        %v912 = vunpack.c.l.b16 %v424
        %v913 = vunpack.c.h.b16 %v424
        %v914 = vunpack.c.l.b16 %v425
        %v915 = vunpack.c.l.b16 %v426
        %v916 = vunpack.c.h.b16 %v426
        %v917 = vunpack.c.l.b16 %v427
        %v918 = vunpack.c.l.b16 %v428
        %v919 = vunpack.c.h.b16 %v428
        %v920 = vunpack.c.l.b16 %v429
        %v921 = vunpack.c.l.b16 %v430
        %v922 = vunpack.c.h.b16 %v430
        %v923 = vunpack.c.l.b16 %v431
        %v924 = vunpack.c.l.b16 %v432
        %v925 = vunpack.c.h.b16 %v432
        %v926 = vunpack.c.l.b16 %v433
        %v927 = vunpack.c.l.b16 %v434
        %v928 = vunpack.c.h.b16 %v434
        %v929 = vunpack.c.l.b16 %v435
        %v930 = vunpack.c.l.b16 %v436
        %v931 = vunpack.c.h.b16 %v436
        %v932 = vunpack.c.l.b16 %v437
        %v933 = vunpack.c.l.b16 %v438
        %v934 = vunpack.c.h.b16 %v438
        %v935 = vunpack.c.l.b16 %v439
        %v936 = vpack.c.b16 %v795, %v792
        %v937 = vpack.c.b16 %v796, %v793
        %v938 = vpack.c.b16 %v797, %v794
        %v939 = vpack.c.b16 %v801, %v798
        %v940 = vpack.c.b16 %v802, %v799
        %v941 = vpack.c.b16 %v803, %v800
        %v942 = vpack.c.b16 %v807, %v804
        %v943 = vpack.c.b16 %v808, %v805
        %v944 = vpack.c.b16 %v809, %v806
        %v945 = vpack.c.b16 %v813, %v810
        %v946 = vpack.c.b16 %v814, %v811
        %v947 = vpack.c.b16 %v815, %v812
        %v948 = vpack.c.b16 %v819, %v816
        %v949 = vpack.c.b16 %v820, %v817
        %v950 = vpack.c.b16 %v821, %v818
        %v951 = vpack.c.b16 %v825, %v822
        %v952 = vpack.c.b16 %v826, %v823
        %v953 = vpack.c.b16 %v827, %v824
        %v954 = vpack.c.b16 %v831, %v828
        %v955 = vpack.c.b16 %v832, %v829
        %v956 = vpack.c.b16 %v833, %v830
        %v957 = vpack.c.b16 %v837, %v834
        %v958 = vpack.c.b16 %v838, %v835
        %v959 = vpack.c.b16 %v839, %v836
        %v960 = vpack.c.b16 %v843, %v840
        %v961 = vpack.c.b16 %v844, %v841
        %v962 = vpack.c.b16 %v845, %v842
        %v963 = vpack.c.b16 %v849, %v846
        %v964 = vpack.c.b16 %v850, %v847
        %v965 = vpack.c.b16 %v851, %v848
        %v966 = vpack.c.b16 %v855, %v852
        %v967 = vpack.c.b16 %v856, %v853
        %v968 = vpack.c.b16 %v857, %v854
        %v969 = vpack.c.b16 %v861, %v858
        %v970 = vpack.c.b16 %v862, %v859
        %v971 = vpack.c.b16 %v863, %v860
        %v972 = vpack.c.b16 %v867, %v864
        %v973 = vpack.c.b16 %v868, %v865
        %v974 = vpack.c.b16 %v869, %v866
        %v975 = vpack.c.b16 %v873, %v870
        %v976 = vpack.c.b16 %v874, %v871
        %v977 = vpack.c.b16 %v875, %v872
        %v978 = vpack.c.b16 %v879, %v876
        %v979 = vpack.c.b16 %v880, %v877
        %v980 = vpack.c.b16 %v881, %v878
        %v981 = vpack.c.b16 %v885, %v882
        %v982 = vpack.c.b16 %v886, %v883
        %v983 = vpack.c.b16 %v887, %v884
        %v984 = vpack.c.b16 %v891, %v888
        %v985 = vpack.c.b16 %v892, %v889
        %v986 = vpack.c.b16 %v893, %v890
        %v987 = vpack.c.b16 %v897, %v894
        %v988 = vpack.c.b16 %v898, %v895
        %v989 = vpack.c.b16 %v899, %v896
        %v990 = vpack.c.b16 %v903, %v900
        %v991 = vpack.c.b16 %v904, %v901
        %v992 = vpack.c.b16 %v905, %v902
        %v993 = vpack.c.b16 %v909, %v906
        %v994 = vpack.c.b16 %v910, %v907
        %v995 = vpack.c.b16 %v911, %v908
        %v996 = vpack.c.b16 %v915, %v912
        %v997 = vpack.c.b16 %v916, %v913
        %v998 = vpack.c.b16 %v917, %v914
        %v999 = vpack.c.b16 %v921, %v918
        %v1000 = vpack.c.b16 %v922, %v919
        %v1001 = vpack.c.b16 %v923, %v920
        %v1002 = vpack.c.b16 %v927, %v924
        %v1003 = vpack.c.b16 %v928, %v925
        %v1004 = vpack.c.b16 %v929, %v926
        %v1005 = vpack.c.b16 %v933, %v930
        %v1006 = vpack.c.b16 %v934, %v931
        %v1007 = vpack.c.b16 %v935, %v932
        %1080 = vmatpush.bf16.msra.mxu0 %v957
        %1081 = vmatpush.bf16.msra.mxu0 %v954
        %1082 = vmatpush.bf16.msra.mxu0 %v951
        %1083 = vmatpush.bf16.msra.mxu0 %v948
        %1084 = vmatpush.bf16.msra.mxu0 %v945
        %1085 = vmatpush.bf16.msra.mxu0 %v942
        %1086 = vmatpush.bf16.msra.mxu0 %v939
        %1087 = vmatpush.bf16.msra.mxu0 %v936
        %1088 = vmatmul.bf16.gmra.mxu0 %v600
        %v1089 = vpop.f32.mrf.mxu0
        %v1090 = vadd.f32 0.0, %v1089
        %v1091 = vpop.f32.mrf.mxu0
        %v1092 = vadd.f32 0.0, %v1091
        %1093 = vmatmul.bf16.gmra.mxu0 %v603
        %v1094 = vpop.f32.mrf.mxu0
        %v1095 = vadd.f32 0.0, %v1094
        %v1096 = vpop.f32.mrf.mxu0
        %v1097 = vadd.f32 0.0, %v1096
        %1098 = vmatmul.bf16.gmra.mxu0 %v606
        %v1099 = vpop.f32.mrf.mxu0
        %v1100 = vadd.f32 0.0, %v1099
        %v1101 = vpop.f32.mrf.mxu0
        %v1102 = vadd.f32 0.0, %v1101
        %1103 = vmatmul.bf16.gmra.mxu0 %v609
        %v1104 = vpop.f32.mrf.mxu0
        %v1105 = vadd.f32 0.0, %v1104
        %v1106 = vpop.f32.mrf.mxu0
        %v1107 = vadd.f32 0.0, %v1106
        %1108 = vmatmul.bf16.gmra.mxu0 %v612
        %v1109 = vpop.f32.mrf.mxu0
        %v1110 = vadd.f32 0.0, %v1109
        %v1111 = vpop.f32.mrf.mxu0
        %v1112 = vadd.f32 0.0, %v1111
        %1113 = vmatmul.bf16.gmra.mxu0 %v615
        %v1114 = vpop.f32.mrf.mxu0
        %v1115 = vadd.f32 0.0, %v1114
        %v1116 = vpop.f32.mrf.mxu0
        %v1117 = vadd.f32 0.0, %v1116
        %1118 = vmatmul.bf16.gmra.mxu0 %v618
        %v1119 = vpop.f32.mrf.mxu0
        %v1120 = vadd.f32 0.0, %v1119
        %v1121 = vpop.f32.mrf.mxu0
        %v1122 = vadd.f32 0.0, %v1121
        %1123 = vmatmul.bf16.gmra.mxu0 %v621
        %v1124 = vpop.f32.mrf.mxu0
        %v1125 = vadd.f32 0.0, %v1124
        %v1126 = vpop.f32.mrf.mxu0
        %v1127 = vadd.f32 0.0, %v1126
        %1128 = vmatmul.bf16.gmra.mxu0 %v624
        %v1129 = vpop.f32.mrf.mxu0
        %v1130 = vadd.f32 0.0, %v1129
        %v1131 = vpop.f32.mrf.mxu0
        %v1132 = vadd.f32 0.0, %v1131
        %1133 = vmatmul.bf16.gmra.mxu0 %v627
        %v1134 = vpop.f32.mrf.mxu0
        %v1135 = vadd.f32 0.0, %v1134
        %v1136 = vpop.f32.mrf.mxu0
        %v1137 = vadd.f32 0.0, %v1136
        %1138 = vmatmul.bf16.gmra.mxu0 %v630
        %v1139 = vpop.f32.mrf.mxu0
        %v1140 = vadd.f32 0.0, %v1139
        %v1141 = vpop.f32.mrf.mxu0
        %v1142 = vadd.f32 0.0, %v1141
        %1143 = vmatmul.bf16.gmra.mxu0 %v633
        %v1144 = vpop.f32.mrf.mxu0
        %v1145 = vadd.f32 0.0, %v1144
        %v1146 = vpop.f32.mrf.mxu0
        %v1147 = vadd.f32 0.0, %v1146
        %1148 = vmatmul.bf16.gmra.mxu0 %v636
        %v1149 = vpop.f32.mrf.mxu0
        %v1150 = vadd.f32 0.0, %v1149
        %v1151 = vpop.f32.mrf.mxu0
        %v1152 = vadd.f32 0.0, %v1151
        %1153 = vmatmul.bf16.gmra.mxu0 %v639
        %v1154 = vpop.f32.mrf.mxu0
        %v1155 = vadd.f32 0.0, %v1154
        %v1156 = vpop.f32.mrf.mxu0
        %v1157 = vadd.f32 0.0, %v1156
        %1158 = vmatmul.bf16.gmra.mxu0 %v642
        %v1159 = vpop.f32.mrf.mxu0
        %v1160 = vadd.f32 0.0, %v1159
        %v1161 = vpop.f32.mrf.mxu0
        %v1162 = vadd.f32 0.0, %v1161
        %1163 = vmatmul.bf16.gmra.mxu0 %v645
        %v1164 = vpop.f32.mrf.mxu0
        %v1165 = vadd.f32 0.0, %v1164
        %v1166 = vpop.f32.mrf.mxu0
        %v1167 = vadd.f32 0.0, %v1166
        %1168 = vdwg.mxu0
        %1169 = vmatpush.bf16.msra.mxu0 %v981
        %1170 = vmatpush.bf16.msra.mxu0 %v978
        %1171 = vmatpush.bf16.msra.mxu0 %v975
        %1172 = vmatpush.bf16.msra.mxu0 %v972
        %1173 = vmatpush.bf16.msra.mxu0 %v969
        %1174 = vmatpush.bf16.msra.mxu0 %v966
        %1175 = vmatpush.bf16.msra.mxu0 %v963
        %1176 = vmatpush.bf16.msra.mxu0 %v960
        %1177 = vmatmul.bf16.gmra.mxu0 %v601
        %v1178 = vpop.f32.mrf.mxu0
        %v1179 = vadd.f32 %v1090, %v1178
        %v1180 = vpop.f32.mrf.mxu0
        %v1181 = vadd.f32 %v1092, %v1180
        %1182 = vmatmul.bf16.gmra.mxu0 %v604
        %v1183 = vpop.f32.mrf.mxu0
        %v1184 = vadd.f32 %v1095, %v1183
        %v1185 = vpop.f32.mrf.mxu0
        %v1186 = vadd.f32 %v1097, %v1185
        %1187 = vmatmul.bf16.gmra.mxu0 %v607
        %v1188 = vpop.f32.mrf.mxu0
        %v1189 = vadd.f32 %v1100, %v1188
        %v1190 = vpop.f32.mrf.mxu0
        %v1191 = vadd.f32 %v1102, %v1190
        %1192 = vmatmul.bf16.gmra.mxu0 %v610
        %v1193 = vpop.f32.mrf.mxu0
        %v1194 = vadd.f32 %v1105, %v1193
        %v1195 = vpop.f32.mrf.mxu0
        %v1196 = vadd.f32 %v1107, %v1195
        %1197 = vmatmul.bf16.gmra.mxu0 %v613
        %v1198 = vpop.f32.mrf.mxu0
        %v1199 = vadd.f32 %v1110, %v1198
        %v1200 = vpop.f32.mrf.mxu0
        %v1201 = vadd.f32 %v1112, %v1200
        %1202 = vmatmul.bf16.gmra.mxu0 %v616
        %v1203 = vpop.f32.mrf.mxu0
        %v1204 = vadd.f32 %v1115, %v1203
        %v1205 = vpop.f32.mrf.mxu0
        %v1206 = vadd.f32 %v1117, %v1205
        %1207 = vmatmul.bf16.gmra.mxu0 %v619
        %v1208 = vpop.f32.mrf.mxu0
        %v1209 = vadd.f32 %v1120, %v1208
        %v1210 = vpop.f32.mrf.mxu0
        %v1211 = vadd.f32 %v1122, %v1210
        %1212 = vmatmul.bf16.gmra.mxu0 %v622
        %v1213 = vpop.f32.mrf.mxu0
        %v1214 = vadd.f32 %v1125, %v1213
        %v1215 = vpop.f32.mrf.mxu0
        %v1216 = vadd.f32 %v1127, %v1215
        %1217 = vmatmul.bf16.gmra.mxu0 %v625
        %v1218 = vpop.f32.mrf.mxu0
        %v1219 = vadd.f32 %v1130, %v1218
        %v1220 = vpop.f32.mrf.mxu0
        %v1221 = vadd.f32 %v1132, %v1220
        %1222 = vmatmul.bf16.gmra.mxu0 %v628
        %v1223 = vpop.f32.mrf.mxu0
        %v1224 = vadd.f32 %v1135, %v1223
        %v1225 = vpop.f32.mrf.mxu0
        %v1226 = vadd.f32 %v1137, %v1225
        %1227 = vmatmul.bf16.gmra.mxu0 %v631
        %v1228 = vpop.f32.mrf.mxu0
        %v1229 = vadd.f32 %v1140, %v1228
        %v1230 = vpop.f32.mrf.mxu0
        %v1231 = vadd.f32 %v1142, %v1230
        %1232 = vmatmul.bf16.gmra.mxu0 %v634
        %v1233 = vpop.f32.mrf.mxu0
        %v1234 = vadd.f32 %v1145, %v1233
        %v1235 = vpop.f32.mrf.mxu0
        %v1236 = vadd.f32 %v1147, %v1235
        %1237 = vmatmul.bf16.gmra.mxu0 %v637
        %v1238 = vpop.f32.mrf.mxu0
        %v1239 = vadd.f32 %v1150, %v1238
        %v1240 = vpop.f32.mrf.mxu0
        %v1241 = vadd.f32 %v1152, %v1240
        %1242 = vmatmul.bf16.gmra.mxu0 %v640
        %v1243 = vpop.f32.mrf.mxu0
        %v1244 = vadd.f32 %v1155, %v1243
        %v1245 = vpop.f32.mrf.mxu0
        %v1246 = vadd.f32 %v1157, %v1245
        %1247 = vmatmul.bf16.gmra.mxu0 %v643
        %v1248 = vpop.f32.mrf.mxu0
        %v1249 = vadd.f32 %v1160, %v1248
        %v1250 = vpop.f32.mrf.mxu0
        %v1251 = vadd.f32 %v1162, %v1250
        %1252 = vmatmul.bf16.gmra.mxu0 %v646
        %v1253 = vpop.f32.mrf.mxu0
        %v1254 = vadd.f32 %v1165, %v1253
        %v1255 = vpop.f32.mrf.mxu0
        %v1256 = vadd.f32 %v1167, %v1255
        %1257 = vdwg.mxu0
        %1258 = vmatpush.bf16.msra.mxu0 %v1005
        %1259 = vmatpush.bf16.msra.mxu0 %v1002
        %1260 = vmatpush.bf16.msra.mxu0 %v999
        %1261 = vmatpush.bf16.msra.mxu0 %v996
        %1262 = vmatpush.bf16.msra.mxu0 %v993
        %1263 = vmatpush.bf16.msra.mxu0 %v990
        %1264 = vmatpush.bf16.msra.mxu0 %v987
        %1265 = vmatpush.bf16.msra.mxu0 %v984
        %1266 = vmatmul.bf16.gmra.mxu0 %v602
        %v1267 = vpop.f32.mrf.mxu0
        %v1268 = vadd.f32 %v1179, %v1267
        %v1269 = vpop.f32.mrf.mxu0
        %v1270 = vadd.f32 %v1181, %v1269
        %1271 = vmatmul.bf16.gmra.mxu0 %v605
        %v1272 = vpop.f32.mrf.mxu0
        %v1273 = vadd.f32 %v1184, %v1272
        %v1274 = vpop.f32.mrf.mxu0
        %v1275 = vadd.f32 %v1186, %v1274
        %1276 = vmatmul.bf16.gmra.mxu0 %v608
        %v1277 = vpop.f32.mrf.mxu0
        %v1278 = vadd.f32 %v1189, %v1277
        %v1279 = vpop.f32.mrf.mxu0
        %v1280 = vadd.f32 %v1191, %v1279
        %1281 = vmatmul.bf16.gmra.mxu0 %v611
        %v1282 = vpop.f32.mrf.mxu0
        %v1283 = vadd.f32 %v1194, %v1282
        %v1284 = vpop.f32.mrf.mxu0
        %v1285 = vadd.f32 %v1196, %v1284
        %1286 = vmatmul.bf16.gmra.mxu0 %v614
        %v1287 = vpop.f32.mrf.mxu0
        %v1288 = vadd.f32 %v1199, %v1287
        %v1289 = vpop.f32.mrf.mxu0
        %v1290 = vadd.f32 %v1201, %v1289
        %1291 = vmatmul.bf16.gmra.mxu0 %v617
        %v1292 = vpop.f32.mrf.mxu0
        %v1293 = vadd.f32 %v1204, %v1292
        %v1294 = vpop.f32.mrf.mxu0
        %v1295 = vadd.f32 %v1206, %v1294
        %1296 = vmatmul.bf16.gmra.mxu0 %v620
        %v1297 = vpop.f32.mrf.mxu0
        %v1298 = vadd.f32 %v1209, %v1297
        %v1299 = vpop.f32.mrf.mxu0
        %v1300 = vadd.f32 %v1211, %v1299
        %1301 = vmatmul.bf16.gmra.mxu0 %v623
        %v1302 = vpop.f32.mrf.mxu0
        %v1303 = vadd.f32 %v1214, %v1302
        %v1304 = vpop.f32.mrf.mxu0
        %v1305 = vadd.f32 %v1216, %v1304
        %1306 = vmatmul.bf16.gmra.mxu0 %v626
        %v1307 = vpop.f32.mrf.mxu0
        %v1308 = vadd.f32 %v1219, %v1307
        %v1309 = vpop.f32.mrf.mxu0
        %v1310 = vadd.f32 %v1221, %v1309
        %1311 = vmatmul.bf16.gmra.mxu0 %v629
        %v1312 = vpop.f32.mrf.mxu0
        %v1313 = vadd.f32 %v1224, %v1312
        %v1314 = vpop.f32.mrf.mxu0
        %v1315 = vadd.f32 %v1226, %v1314
        %1316 = vmatmul.bf16.gmra.mxu0 %v632
        %v1317 = vpop.f32.mrf.mxu0
        %v1318 = vadd.f32 %v1229, %v1317
        %v1319 = vpop.f32.mrf.mxu0
        %v1320 = vadd.f32 %v1231, %v1319
        %1321 = vmatmul.bf16.gmra.mxu0 %v635
        %v1322 = vpop.f32.mrf.mxu0
        %v1323 = vadd.f32 %v1234, %v1322
        %v1324 = vpop.f32.mrf.mxu0
        %v1325 = vadd.f32 %v1236, %v1324
        %1326 = vmatmul.bf16.gmra.mxu0 %v638
        %v1327 = vpop.f32.mrf.mxu0
        %v1328 = vadd.f32 %v1239, %v1327
        %v1329 = vpop.f32.mrf.mxu0
        %v1330 = vadd.f32 %v1241, %v1329
        %1331 = vmatmul.bf16.gmra.mxu0 %v641
        %v1332 = vpop.f32.mrf.mxu0
        %v1333 = vadd.f32 %v1244, %v1332
        %v1334 = vpop.f32.mrf.mxu0
        %v1335 = vadd.f32 %v1246, %v1334
        %1336 = vmatmul.bf16.gmra.mxu0 %v644
        %v1337 = vpop.f32.mrf.mxu0
        %v1338 = vadd.f32 %v1249, %v1337
        %v1339 = vpop.f32.mrf.mxu0
        %v1340 = vadd.f32 %v1251, %v1339
        %1341 = vmatmul.bf16.gmra.mxu0 %v647
        %v1342 = vpop.f32.mrf.mxu0
        %v1343 = vadd.f32 %v1254, %v1342
        %v1344 = vpop.f32.mrf.mxu0
        %v1345 = vadd.f32 %v1256, %v1344
        %1346 = vdwg.mxu0
        %1347 = vmatpush.bf16.msra.mxu0 %v958
        %1348 = vmatpush.bf16.msra.mxu0 %v955
        %1349 = vmatpush.bf16.msra.mxu0 %v952
        %1350 = vmatpush.bf16.msra.mxu0 %v949
        %1351 = vmatpush.bf16.msra.mxu0 %v946
        %1352 = vmatpush.bf16.msra.mxu0 %v943
        %1353 = vmatpush.bf16.msra.mxu0 %v940
        %1354 = vmatpush.bf16.msra.mxu0 %v937
        %1355 = vmatmul.bf16.gmra.mxu0 %v600
        %v1356 = vpop.f32.mrf.mxu0
        %v1357 = vadd.f32 0.0, %v1356
        %v1358 = vpop.f32.mrf.mxu0
        %v1359 = vadd.f32 0.0, %v1358
        %1360 = vmatmul.bf16.gmra.mxu0 %v603
        %v1361 = vpop.f32.mrf.mxu0
        %v1362 = vadd.f32 0.0, %v1361
        %v1363 = vpop.f32.mrf.mxu0
        %v1364 = vadd.f32 0.0, %v1363
        %1365 = vmatmul.bf16.gmra.mxu0 %v606
        %v1366 = vpop.f32.mrf.mxu0
        %v1367 = vadd.f32 0.0, %v1366
        %v1368 = vpop.f32.mrf.mxu0
        %v1369 = vadd.f32 0.0, %v1368
        %1370 = vmatmul.bf16.gmra.mxu0 %v609
        %v1371 = vpop.f32.mrf.mxu0
        %v1372 = vadd.f32 0.0, %v1371
        %v1373 = vpop.f32.mrf.mxu0
        %v1374 = vadd.f32 0.0, %v1373
        %1375 = vmatmul.bf16.gmra.mxu0 %v612
        %v1376 = vpop.f32.mrf.mxu0
        %v1377 = vadd.f32 0.0, %v1376
        %v1378 = vpop.f32.mrf.mxu0
        %v1379 = vadd.f32 0.0, %v1378
        %1380 = vmatmul.bf16.gmra.mxu0 %v615
        %v1381 = vpop.f32.mrf.mxu0
        %v1382 = vadd.f32 0.0, %v1381
        %v1383 = vpop.f32.mrf.mxu0
        %v1384 = vadd.f32 0.0, %v1383
        %1385 = vmatmul.bf16.gmra.mxu0 %v618
        %v1386 = vpop.f32.mrf.mxu0
        %v1387 = vadd.f32 0.0, %v1386
        %v1388 = vpop.f32.mrf.mxu0
        %v1389 = vadd.f32 0.0, %v1388
        %1390 = vmatmul.bf16.gmra.mxu0 %v621
        %v1391 = vpop.f32.mrf.mxu0
        %v1392 = vadd.f32 0.0, %v1391
        %v1393 = vpop.f32.mrf.mxu0
        %v1394 = vadd.f32 0.0, %v1393
        %1395 = vmatmul.bf16.gmra.mxu0 %v624
        %v1396 = vpop.f32.mrf.mxu0
        %v1397 = vadd.f32 0.0, %v1396
        %v1398 = vpop.f32.mrf.mxu0
        %v1399 = vadd.f32 0.0, %v1398
        %1400 = vmatmul.bf16.gmra.mxu0 %v627
        %v1401 = vpop.f32.mrf.mxu0
        %v1402 = vadd.f32 0.0, %v1401
        %v1403 = vpop.f32.mrf.mxu0
        %v1404 = vadd.f32 0.0, %v1403
        %1405 = vmatmul.bf16.gmra.mxu0 %v630
        %v1406 = vpop.f32.mrf.mxu0
        %v1407 = vadd.f32 0.0, %v1406
        %v1408 = vpop.f32.mrf.mxu0
        %v1409 = vadd.f32 0.0, %v1408
        %1410 = vmatmul.bf16.gmra.mxu0 %v633
        %v1411 = vpop.f32.mrf.mxu0
        %v1412 = vadd.f32 0.0, %v1411
        %v1413 = vpop.f32.mrf.mxu0
        %v1414 = vadd.f32 0.0, %v1413
        %1415 = vmatmul.bf16.gmra.mxu0 %v636
        %v1416 = vpop.f32.mrf.mxu0
        %v1417 = vadd.f32 0.0, %v1416
        %v1418 = vpop.f32.mrf.mxu0
        %v1419 = vadd.f32 0.0, %v1418
        %1420 = vmatmul.bf16.gmra.mxu0 %v639
        %v1421 = vpop.f32.mrf.mxu0
        %v1422 = vadd.f32 0.0, %v1421
        %v1423 = vpop.f32.mrf.mxu0
        %v1424 = vadd.f32 0.0, %v1423
        %1425 = vmatmul.bf16.gmra.mxu0 %v642
        %v1426 = vpop.f32.mrf.mxu0
        %v1427 = vadd.f32 0.0, %v1426
        %v1428 = vpop.f32.mrf.mxu0
        %v1429 = vadd.f32 0.0, %v1428
        %1430 = vmatmul.bf16.gmra.mxu0 %v645
        %v1431 = vpop.f32.mrf.mxu0
        %v1432 = vadd.f32 0.0, %v1431
        %v1433 = vpop.f32.mrf.mxu0
        %v1434 = vadd.f32 0.0, %v1433
        %1435 = vdwg.mxu0
        %1436 = vmatpush.bf16.msra.mxu0 %v982
        %1437 = vmatpush.bf16.msra.mxu0 %v979
        %1438 = vmatpush.bf16.msra.mxu0 %v976
        %1439 = vmatpush.bf16.msra.mxu0 %v973
        %1440 = vmatpush.bf16.msra.mxu0 %v970
        %1441 = vmatpush.bf16.msra.mxu0 %v967
        %1442 = vmatpush.bf16.msra.mxu0 %v964
        %1443 = vmatpush.bf16.msra.mxu0 %v961
        %1444 = vmatmul.bf16.gmra.mxu0 %v601
        %v1445 = vpop.f32.mrf.mxu0
        %v1446 = vadd.f32 %v1357, %v1445
        %v1447 = vpop.f32.mrf.mxu0
        %v1448 = vadd.f32 %v1359, %v1447
        %1449 = vmatmul.bf16.gmra.mxu0 %v604
        %v1450 = vpop.f32.mrf.mxu0
        %v1451 = vadd.f32 %v1362, %v1450
        %v1452 = vpop.f32.mrf.mxu0
        %v1453 = vadd.f32 %v1364, %v1452
        %1454 = vmatmul.bf16.gmra.mxu0 %v607
        %v1455 = vpop.f32.mrf.mxu0
        %v1456 = vadd.f32 %v1367, %v1455
        %v1457 = vpop.f32.mrf.mxu0
        %v1458 = vadd.f32 %v1369, %v1457
        %1459 = vmatmul.bf16.gmra.mxu0 %v610
        %v1460 = vpop.f32.mrf.mxu0
        %v1461 = vadd.f32 %v1372, %v1460
        %v1462 = vpop.f32.mrf.mxu0
        %v1463 = vadd.f32 %v1374, %v1462
        %1464 = vmatmul.bf16.gmra.mxu0 %v613
        %v1465 = vpop.f32.mrf.mxu0
        %v1466 = vadd.f32 %v1377, %v1465
        %v1467 = vpop.f32.mrf.mxu0
        %v1468 = vadd.f32 %v1379, %v1467
        %1469 = vmatmul.bf16.gmra.mxu0 %v616
        %v1470 = vpop.f32.mrf.mxu0
        %v1471 = vadd.f32 %v1382, %v1470
        %v1472 = vpop.f32.mrf.mxu0
        %v1473 = vadd.f32 %v1384, %v1472
        %1474 = vmatmul.bf16.gmra.mxu0 %v619
        %v1475 = vpop.f32.mrf.mxu0
        %v1476 = vadd.f32 %v1387, %v1475
        %v1477 = vpop.f32.mrf.mxu0
        %v1478 = vadd.f32 %v1389, %v1477
        %1479 = vmatmul.bf16.gmra.mxu0 %v622
        %v1480 = vpop.f32.mrf.mxu0
        %v1481 = vadd.f32 %v1392, %v1480
        %v1482 = vpop.f32.mrf.mxu0
        %v1483 = vadd.f32 %v1394, %v1482
        %1484 = vmatmul.bf16.gmra.mxu0 %v625
        %v1485 = vpop.f32.mrf.mxu0
        %v1486 = vadd.f32 %v1397, %v1485
        %v1487 = vpop.f32.mrf.mxu0
        %v1488 = vadd.f32 %v1399, %v1487
        %1489 = vmatmul.bf16.gmra.mxu0 %v628
        %v1490 = vpop.f32.mrf.mxu0
        %v1491 = vadd.f32 %v1402, %v1490
        %v1492 = vpop.f32.mrf.mxu0
        %v1493 = vadd.f32 %v1404, %v1492
        %1494 = vmatmul.bf16.gmra.mxu0 %v631
        %v1495 = vpop.f32.mrf.mxu0
        %v1496 = vadd.f32 %v1407, %v1495
        %v1497 = vpop.f32.mrf.mxu0
        %v1498 = vadd.f32 %v1409, %v1497
        %1499 = vmatmul.bf16.gmra.mxu0 %v634
        %v1500 = vpop.f32.mrf.mxu0
        %v1501 = vadd.f32 %v1412, %v1500
        %v1502 = vpop.f32.mrf.mxu0
        %v1503 = vadd.f32 %v1414, %v1502
        %1504 = vmatmul.bf16.gmra.mxu0 %v637
        %v1505 = vpop.f32.mrf.mxu0
        %v1506 = vadd.f32 %v1417, %v1505
        %v1507 = vpop.f32.mrf.mxu0
        %v1508 = vadd.f32 %v1419, %v1507
        %1509 = vmatmul.bf16.gmra.mxu0 %v640
        %v1510 = vpop.f32.mrf.mxu0
        %v1511 = vadd.f32 %v1422, %v1510
        %v1512 = vpop.f32.mrf.mxu0
        %v1513 = vadd.f32 %v1424, %v1512
        %1514 = vmatmul.bf16.gmra.mxu0 %v643
        %v1515 = vpop.f32.mrf.mxu0
        %v1516 = vadd.f32 %v1427, %v1515
        %v1517 = vpop.f32.mrf.mxu0
        %v1518 = vadd.f32 %v1429, %v1517
        %1519 = vmatmul.bf16.gmra.mxu0 %v646
        %v1520 = vpop.f32.mrf.mxu0
        %v1521 = vadd.f32 %v1432, %v1520
        %v1522 = vpop.f32.mrf.mxu0
        %v1523 = vadd.f32 %v1434, %v1522
        %1524 = vdwg.mxu0
        %1525 = vmatpush.bf16.msra.mxu0 %v1006
        %1526 = vmatpush.bf16.msra.mxu0 %v1003
        %1527 = vmatpush.bf16.msra.mxu0 %v1000
        %1528 = vmatpush.bf16.msra.mxu0 %v997
        %1529 = vmatpush.bf16.msra.mxu0 %v994
        %1530 = vmatpush.bf16.msra.mxu0 %v991
        %1531 = vmatpush.bf16.msra.mxu0 %v988
        %1532 = vmatpush.bf16.msra.mxu0 %v985
        %1533 = vmatmul.bf16.gmra.mxu0 %v602
        %v1534 = vpop.f32.mrf.mxu0
        %v1535 = vadd.f32 %v1446, %v1534
        %v1536 = vpop.f32.mrf.mxu0
        %v1537 = vadd.f32 %v1448, %v1536
        %1538 = vmatmul.bf16.gmra.mxu0 %v605
        %v1539 = vpop.f32.mrf.mxu0
        %v1540 = vadd.f32 %v1451, %v1539
        %v1541 = vpop.f32.mrf.mxu0
        %v1542 = vadd.f32 %v1453, %v1541
        %1543 = vmatmul.bf16.gmra.mxu0 %v608
        %v1544 = vpop.f32.mrf.mxu0
        %v1545 = vadd.f32 %v1456, %v1544
        %v1546 = vpop.f32.mrf.mxu0
        %v1547 = vadd.f32 %v1458, %v1546
        %1548 = vmatmul.bf16.gmra.mxu0 %v611
        %v1549 = vpop.f32.mrf.mxu0
        %v1550 = vadd.f32 %v1461, %v1549
        %v1551 = vpop.f32.mrf.mxu0
        %v1552 = vadd.f32 %v1463, %v1551
        %1553 = vmatmul.bf16.gmra.mxu0 %v614
        %v1554 = vpop.f32.mrf.mxu0
        %v1555 = vadd.f32 %v1466, %v1554
        %v1556 = vpop.f32.mrf.mxu0
        %v1557 = vadd.f32 %v1468, %v1556
        %1558 = vmatmul.bf16.gmra.mxu0 %v617
        %v1559 = vpop.f32.mrf.mxu0
        %v1560 = vadd.f32 %v1471, %v1559
        %v1561 = vpop.f32.mrf.mxu0
        %v1562 = vadd.f32 %v1473, %v1561
        %1563 = vmatmul.bf16.gmra.mxu0 %v620
        %v1564 = vpop.f32.mrf.mxu0
        %v1565 = vadd.f32 %v1476, %v1564
        %v1566 = vpop.f32.mrf.mxu0
        %v1567 = vadd.f32 %v1478, %v1566
        %1568 = vmatmul.bf16.gmra.mxu0 %v623
        %v1569 = vpop.f32.mrf.mxu0
        %v1570 = vadd.f32 %v1481, %v1569
        %v1571 = vpop.f32.mrf.mxu0
        %v1572 = vadd.f32 %v1483, %v1571
        %1573 = vmatmul.bf16.gmra.mxu0 %v626
        %v1574 = vpop.f32.mrf.mxu0
        %v1575 = vadd.f32 %v1486, %v1574
        %v1576 = vpop.f32.mrf.mxu0
        %v1577 = vadd.f32 %v1488, %v1576
        %1578 = vmatmul.bf16.gmra.mxu0 %v629
        %v1579 = vpop.f32.mrf.mxu0
        %v1580 = vadd.f32 %v1491, %v1579
        %v1581 = vpop.f32.mrf.mxu0
        %v1582 = vadd.f32 %v1493, %v1581
        %1583 = vmatmul.bf16.gmra.mxu0 %v632
        %v1584 = vpop.f32.mrf.mxu0
        %v1585 = vadd.f32 %v1496, %v1584
        %v1586 = vpop.f32.mrf.mxu0
        %v1587 = vadd.f32 %v1498, %v1586
        %1588 = vmatmul.bf16.gmra.mxu0 %v635
        %v1589 = vpop.f32.mrf.mxu0
        %v1590 = vadd.f32 %v1501, %v1589
        %v1591 = vpop.f32.mrf.mxu0
        %v1592 = vadd.f32 %v1503, %v1591
        %1593 = vmatmul.bf16.gmra.mxu0 %v638
        %v1594 = vpop.f32.mrf.mxu0
        %v1595 = vadd.f32 %v1506, %v1594
        %v1596 = vpop.f32.mrf.mxu0
        %v1597 = vadd.f32 %v1508, %v1596
        %1598 = vmatmul.bf16.gmra.mxu0 %v641
        %v1599 = vpop.f32.mrf.mxu0
        %v1600 = vadd.f32 %v1511, %v1599
        %v1601 = vpop.f32.mrf.mxu0
        %v1602 = vadd.f32 %v1513, %v1601
        %1603 = vmatmul.bf16.gmra.mxu0 %v644
        %v1604 = vpop.f32.mrf.mxu0
        %v1605 = vadd.f32 %v1516, %v1604
        %v1606 = vpop.f32.mrf.mxu0
        %v1607 = vadd.f32 %v1518, %v1606
        %1608 = vmatmul.bf16.gmra.mxu0 %v647
        %v1609 = vpop.f32.mrf.mxu0
        %v1610 = vadd.f32 %v1521, %v1609
        %v1611 = vpop.f32.mrf.mxu0
        %v1612 = vadd.f32 %v1523, %v1611
        %1613 = vdwg.mxu0
        %1614 = vmatpush.bf16.msra.mxu0 %v959
        %1615 = vmatpush.bf16.msra.mxu0 %v956
        %1616 = vmatpush.bf16.msra.mxu0 %v953
        %1617 = vmatpush.bf16.msra.mxu0 %v950
        %1618 = vmatpush.bf16.msra.mxu0 %v947
        %1619 = vmatpush.bf16.msra.mxu0 %v944
        %1620 = vmatpush.bf16.msra.mxu0 %v941
        %1621 = vmatpush.bf16.msra.mxu0 %v938
        %1622 = vmatmul.bf16.gmra.mxu0 %v600
        %v1623 = vpop.f32.mrf.mxu0
        %v1624 = vadd.f32 0.0, %v1623
        %v1625 = vpop.f32.mrf.mxu0
        %v1626 = vadd.f32 0.0, %v1625
        %1627 = vmatmul.bf16.gmra.mxu0 %v603
        %v1628 = vpop.f32.mrf.mxu0
        %v1629 = vadd.f32 0.0, %v1628
        %v1630 = vpop.f32.mrf.mxu0
        %v1631 = vadd.f32 0.0, %v1630
        %1632 = vmatmul.bf16.gmra.mxu0 %v606
        %v1633 = vpop.f32.mrf.mxu0
        %v1634 = vadd.f32 0.0, %v1633
        %v1635 = vpop.f32.mrf.mxu0
        %v1636 = vadd.f32 0.0, %v1635
        %1637 = vmatmul.bf16.gmra.mxu0 %v609
        %v1638 = vpop.f32.mrf.mxu0
        %v1639 = vadd.f32 0.0, %v1638
        %v1640 = vpop.f32.mrf.mxu0
        %v1641 = vadd.f32 0.0, %v1640
        %1642 = vmatmul.bf16.gmra.mxu0 %v612
        %v1643 = vpop.f32.mrf.mxu0
        %v1644 = vadd.f32 0.0, %v1643
        %v1645 = vpop.f32.mrf.mxu0
        %v1646 = vadd.f32 0.0, %v1645
        %1647 = vmatmul.bf16.gmra.mxu0 %v615
        %v1648 = vpop.f32.mrf.mxu0
        %v1649 = vadd.f32 0.0, %v1648
        %v1650 = vpop.f32.mrf.mxu0
        %v1651 = vadd.f32 0.0, %v1650
        %1652 = vmatmul.bf16.gmra.mxu0 %v618
        %v1653 = vpop.f32.mrf.mxu0
        %v1654 = vadd.f32 0.0, %v1653
        %v1655 = vpop.f32.mrf.mxu0
        %v1656 = vadd.f32 0.0, %v1655
        %1657 = vmatmul.bf16.gmra.mxu0 %v621
        %v1658 = vpop.f32.mrf.mxu0
        %v1659 = vadd.f32 0.0, %v1658
        %v1660 = vpop.f32.mrf.mxu0
        %v1661 = vadd.f32 0.0, %v1660
        %1662 = vmatmul.bf16.gmra.mxu0 %v624
        %v1663 = vpop.f32.mrf.mxu0
        %v1664 = vadd.f32 0.0, %v1663
        %v1665 = vpop.f32.mrf.mxu0
        %v1666 = vadd.f32 0.0, %v1665
        %1667 = vmatmul.bf16.gmra.mxu0 %v627
        %v1668 = vpop.f32.mrf.mxu0
        %v1669 = vadd.f32 0.0, %v1668
        %v1670 = vpop.f32.mrf.mxu0
        %v1671 = vadd.f32 0.0, %v1670
        %1672 = vmatmul.bf16.gmra.mxu0 %v630
        %v1673 = vpop.f32.mrf.mxu0
        %v1674 = vadd.f32 0.0, %v1673
        %v1675 = vpop.f32.mrf.mxu0
        %v1676 = vadd.f32 0.0, %v1675
        %1677 = vmatmul.bf16.gmra.mxu0 %v633
        %v1678 = vpop.f32.mrf.mxu0
        %v1679 = vadd.f32 0.0, %v1678
        %v1680 = vpop.f32.mrf.mxu0
        %v1681 = vadd.f32 0.0, %v1680
        %1682 = vmatmul.bf16.gmra.mxu0 %v636
        %v1683 = vpop.f32.mrf.mxu0
        %v1684 = vadd.f32 0.0, %v1683
        %v1685 = vpop.f32.mrf.mxu0
        %v1686 = vadd.f32 0.0, %v1685
        %1687 = vmatmul.bf16.gmra.mxu0 %v639
        %v1688 = vpop.f32.mrf.mxu0
        %v1689 = vadd.f32 0.0, %v1688
        %v1690 = vpop.f32.mrf.mxu0
        %v1691 = vadd.f32 0.0, %v1690
        %1692 = vmatmul.bf16.gmra.mxu0 %v642
        %v1693 = vpop.f32.mrf.mxu0
        %v1694 = vadd.f32 0.0, %v1693
        %v1695 = vpop.f32.mrf.mxu0
        %v1696 = vadd.f32 0.0, %v1695
        %1697 = vmatmul.bf16.gmra.mxu0 %v645
        %v1698 = vpop.f32.mrf.mxu0
        %v1699 = vadd.f32 0.0, %v1698
        %v1700 = vpop.f32.mrf.mxu0
        %v1701 = vadd.f32 0.0, %v1700
        %1702 = vdwg.mxu0
        %1703 = vmatpush.bf16.msra.mxu0 %v983
        %1704 = vmatpush.bf16.msra.mxu0 %v980
        %1705 = vmatpush.bf16.msra.mxu0 %v977
        %1706 = vmatpush.bf16.msra.mxu0 %v974
        %1707 = vmatpush.bf16.msra.mxu0 %v971
        %1708 = vmatpush.bf16.msra.mxu0 %v968
        %1709 = vmatpush.bf16.msra.mxu0 %v965
        %1710 = vmatpush.bf16.msra.mxu0 %v962
        %1711 = vmatmul.bf16.gmra.mxu0 %v601
        %v1712 = vpop.f32.mrf.mxu0
        %v1713 = vadd.f32 %v1624, %v1712
        %v1714 = vpop.f32.mrf.mxu0
        %v1715 = vadd.f32 %v1626, %v1714
        %1716 = vmatmul.bf16.gmra.mxu0 %v604
        %v1717 = vpop.f32.mrf.mxu0
        %v1718 = vadd.f32 %v1629, %v1717
        %v1719 = vpop.f32.mrf.mxu0
        %v1720 = vadd.f32 %v1631, %v1719
        %1721 = vmatmul.bf16.gmra.mxu0 %v607
        %v1722 = vpop.f32.mrf.mxu0
        %v1723 = vadd.f32 %v1634, %v1722
        %v1724 = vpop.f32.mrf.mxu0
        %v1725 = vadd.f32 %v1636, %v1724
        %1726 = vmatmul.bf16.gmra.mxu0 %v610
        %v1727 = vpop.f32.mrf.mxu0
        %v1728 = vadd.f32 %v1639, %v1727
        %v1729 = vpop.f32.mrf.mxu0
        %v1730 = vadd.f32 %v1641, %v1729
        %1731 = vmatmul.bf16.gmra.mxu0 %v613
        %v1732 = vpop.f32.mrf.mxu0
        %v1733 = vadd.f32 %v1644, %v1732
        %v1734 = vpop.f32.mrf.mxu0
        %v1735 = vadd.f32 %v1646, %v1734
        %1736 = vmatmul.bf16.gmra.mxu0 %v616
        %v1737 = vpop.f32.mrf.mxu0
        %v1738 = vadd.f32 %v1649, %v1737
        %v1739 = vpop.f32.mrf.mxu0
        %v1740 = vadd.f32 %v1651, %v1739
        %1741 = vmatmul.bf16.gmra.mxu0 %v619
        %v1742 = vpop.f32.mrf.mxu0
        %v1743 = vadd.f32 %v1654, %v1742
        %v1744 = vpop.f32.mrf.mxu0
        %v1745 = vadd.f32 %v1656, %v1744
        %1746 = vmatmul.bf16.gmra.mxu0 %v622
        %v1747 = vpop.f32.mrf.mxu0
        %v1748 = vadd.f32 %v1659, %v1747
        %v1749 = vpop.f32.mrf.mxu0
        %v1750 = vadd.f32 %v1661, %v1749
        %1751 = vmatmul.bf16.gmra.mxu0 %v625
        %v1752 = vpop.f32.mrf.mxu0
        %v1753 = vadd.f32 %v1664, %v1752
        %v1754 = vpop.f32.mrf.mxu0
        %v1755 = vadd.f32 %v1666, %v1754
        %1756 = vmatmul.bf16.gmra.mxu0 %v628
        %v1757 = vpop.f32.mrf.mxu0
        %v1758 = vadd.f32 %v1669, %v1757
        %v1759 = vpop.f32.mrf.mxu0
        %v1760 = vadd.f32 %v1671, %v1759
        %1761 = vmatmul.bf16.gmra.mxu0 %v631
        %v1762 = vpop.f32.mrf.mxu0
        %v1763 = vadd.f32 %v1674, %v1762
        %v1764 = vpop.f32.mrf.mxu0
        %v1765 = vadd.f32 %v1676, %v1764
        %1766 = vmatmul.bf16.gmra.mxu0 %v634
        %v1767 = vpop.f32.mrf.mxu0
        %v1768 = vadd.f32 %v1679, %v1767
        %v1769 = vpop.f32.mrf.mxu0
        %v1770 = vadd.f32 %v1681, %v1769
        %1771 = vmatmul.bf16.gmra.mxu0 %v637
        %v1772 = vpop.f32.mrf.mxu0
        %v1773 = vadd.f32 %v1684, %v1772
        %v1774 = vpop.f32.mrf.mxu0
        %v1775 = vadd.f32 %v1686, %v1774
        %1776 = vmatmul.bf16.gmra.mxu0 %v640
        %v1777 = vpop.f32.mrf.mxu0
        %v1778 = vadd.f32 %v1689, %v1777
        %v1779 = vpop.f32.mrf.mxu0
        %v1780 = vadd.f32 %v1691, %v1779
        %1781 = vmatmul.bf16.gmra.mxu0 %v643
        %v1782 = vpop.f32.mrf.mxu0
        %v1783 = vadd.f32 %v1694, %v1782
        %v1784 = vpop.f32.mrf.mxu0
        %v1785 = vadd.f32 %v1696, %v1784
        %1786 = vmatmul.bf16.gmra.mxu0 %v646
        %v1787 = vpop.f32.mrf.mxu0
        %v1788 = vadd.f32 %v1699, %v1787
        %v1789 = vpop.f32.mrf.mxu0
        %v1790 = vadd.f32 %v1701, %v1789
        %1791 = vdwg.mxu0
        %1792 = vmatpush.bf16.msra.mxu0 %v1007
        %1793 = vmatpush.bf16.msra.mxu0 %v1004
        %1794 = vmatpush.bf16.msra.mxu0 %v1001
        %1795 = vmatpush.bf16.msra.mxu0 %v998
        %1796 = vmatpush.bf16.msra.mxu0 %v995
        %1797 = vmatpush.bf16.msra.mxu0 %v992
        %1798 = vmatpush.bf16.msra.mxu0 %v989
        %1799 = vmatpush.bf16.msra.mxu0 %v986
        %1800 = vmatmul.bf16.gmra.mxu0 %v602
        %v1801 = vpop.f32.mrf.mxu0
        %v1802 = vadd.f32 %v1713, %v1801
        %v1803 = vpop.f32.mrf.mxu0
        %v1804 = vadd.f32 %v1715, %v1803
        %1805 = vmatmul.bf16.gmra.mxu0 %v605
        %v1806 = vpop.f32.mrf.mxu0
        %v1807 = vadd.f32 %v1718, %v1806
        %v1808 = vpop.f32.mrf.mxu0
        %v1809 = vadd.f32 %v1720, %v1808
        %1810 = vmatmul.bf16.gmra.mxu0 %v608
        %v1811 = vpop.f32.mrf.mxu0
        %v1812 = vadd.f32 %v1723, %v1811
        %v1813 = vpop.f32.mrf.mxu0
        %v1814 = vadd.f32 %v1725, %v1813
        %1815 = vmatmul.bf16.gmra.mxu0 %v611
        %v1816 = vpop.f32.mrf.mxu0
        %v1817 = vadd.f32 %v1728, %v1816
        %v1818 = vpop.f32.mrf.mxu0
        %v1819 = vadd.f32 %v1730, %v1818
        %1820 = vmatmul.bf16.gmra.mxu0 %v614
        %v1821 = vpop.f32.mrf.mxu0
        %v1822 = vadd.f32 %v1733, %v1821
        %v1823 = vpop.f32.mrf.mxu0
        %v1824 = vadd.f32 %v1735, %v1823
        %1825 = vmatmul.bf16.gmra.mxu0 %v617
        %v1826 = vpop.f32.mrf.mxu0
        %v1827 = vadd.f32 %v1738, %v1826
        %v1828 = vpop.f32.mrf.mxu0
        %v1829 = vadd.f32 %v1740, %v1828
        %1830 = vmatmul.bf16.gmra.mxu0 %v620
        %v1831 = vpop.f32.mrf.mxu0
        %v1832 = vadd.f32 %v1743, %v1831
        %v1833 = vpop.f32.mrf.mxu0
        %v1834 = vadd.f32 %v1745, %v1833
        %1835 = vmatmul.bf16.gmra.mxu0 %v623
        %v1836 = vpop.f32.mrf.mxu0
        %v1837 = vadd.f32 %v1748, %v1836
        %v1838 = vpop.f32.mrf.mxu0
        %v1839 = vadd.f32 %v1750, %v1838
        %1840 = vmatmul.bf16.gmra.mxu0 %v626
        %v1841 = vpop.f32.mrf.mxu0
        %v1842 = vadd.f32 %v1753, %v1841
        %v1843 = vpop.f32.mrf.mxu0
        %v1844 = vadd.f32 %v1755, %v1843
        %1845 = vmatmul.bf16.gmra.mxu0 %v629
        %v1846 = vpop.f32.mrf.mxu0
        %v1847 = vadd.f32 %v1758, %v1846
        %v1848 = vpop.f32.mrf.mxu0
        %v1849 = vadd.f32 %v1760, %v1848
        %1850 = vmatmul.bf16.gmra.mxu0 %v632
        %v1851 = vpop.f32.mrf.mxu0
        %v1852 = vadd.f32 %v1763, %v1851
        %v1853 = vpop.f32.mrf.mxu0
        %v1854 = vadd.f32 %v1765, %v1853
        %1855 = vmatmul.bf16.gmra.mxu0 %v635
        %v1856 = vpop.f32.mrf.mxu0
        %v1857 = vadd.f32 %v1768, %v1856
        %v1858 = vpop.f32.mrf.mxu0
        %v1859 = vadd.f32 %v1770, %v1858
        %1860 = vmatmul.bf16.gmra.mxu0 %v638
        %v1861 = vpop.f32.mrf.mxu0
        %v1862 = vadd.f32 %v1773, %v1861
        %v1863 = vpop.f32.mrf.mxu0
        %v1864 = vadd.f32 %v1775, %v1863
        %1865 = vmatmul.bf16.gmra.mxu0 %v641
        %v1866 = vpop.f32.mrf.mxu0
        %v1867 = vadd.f32 %v1778, %v1866
        %v1868 = vpop.f32.mrf.mxu0
        %v1869 = vadd.f32 %v1780, %v1868
        %1870 = vmatmul.bf16.gmra.mxu0 %v644
        %v1871 = vpop.f32.mrf.mxu0
        %v1872 = vadd.f32 %v1783, %v1871
        %v1873 = vpop.f32.mrf.mxu0
        %v1874 = vadd.f32 %v1785, %v1873
        %1875 = vmatmul.bf16.gmra.mxu0 %v647
        %v1876 = vpop.f32.mrf.mxu0
        %v1877 = vadd.f32 %v1788, %v1876
        %v1878 = vpop.f32.mrf.mxu0
        %v1879 = vadd.f32 %v1790, %v1878
        %1880 = vdwg.mxu0
        %v1881 = vpack.c.bf16 %v1268, %v1268
        %v1882 = vpack.c.bf16 %v1270, %v1270
        %v1883 = vpack.c.bf16 %v1273, %v1273
        %v1884 = vpack.c.bf16 %v1275, %v1275
        %v1885 = vpack.c.bf16 %v1278, %v1278
        %v1886 = vpack.c.bf16 %v1280, %v1280
        %v1887 = vpack.c.bf16 %v1283, %v1283
        %v1888 = vpack.c.bf16 %v1285, %v1285
        %v1889 = vpack.c.bf16 %v1288, %v1288
        %v1890 = vpack.c.bf16 %v1290, %v1290
        %v1891 = vpack.c.bf16 %v1293, %v1293
        %v1892 = vpack.c.bf16 %v1295, %v1295
        %v1893 = vpack.c.bf16 %v1298, %v1298
        %v1894 = vpack.c.bf16 %v1300, %v1300
        %v1895 = vpack.c.bf16 %v1303, %v1303
        %v1896 = vpack.c.bf16 %v1305, %v1305
        %v1897 = vpack.c.bf16 %v1308, %v1308
        %v1898 = vpack.c.bf16 %v1310, %v1310
        %v1899 = vpack.c.bf16 %v1313, %v1313
        %v1900 = vpack.c.bf16 %v1315, %v1315
        %v1901 = vpack.c.bf16 %v1318, %v1318
        %v1902 = vpack.c.bf16 %v1320, %v1320
        %v1903 = vpack.c.bf16 %v1323, %v1323
        %v1904 = vpack.c.bf16 %v1325, %v1325
        %v1905 = vpack.c.bf16 %v1328, %v1328
        %v1906 = vpack.c.bf16 %v1330, %v1330
        %v1907 = vpack.c.bf16 %v1333, %v1333
        %v1908 = vpack.c.bf16 %v1335, %v1335
        %v1909 = vpack.c.bf16 %v1338, %v1338
        %v1910 = vpack.c.bf16 %v1340, %v1340
        %v1911 = vpack.c.bf16 %v1343, %v1343
        %v1912 = vpack.c.bf16 %v1345, %v1345
        %1913 = vst [vmem:[%s261] sm:$0xf] %v1881
        %1914 = vst [vmem:[%s261 + $0x4] sm:$0xf] %v1882
        %1915 = vst [vmem:[%s261 + $0x8] sm:$0xf] %v1883
        %1916 = vst [vmem:[%s261 + $0xc] sm:$0xf] %v1884
        %1917 = vst [vmem:[%s261 + $0x10] sm:$0xf] %v1885
        %1918 = vst [vmem:[%s261 + $0x14] sm:$0xf] %v1886
        %1919 = vst [vmem:[%s261 + $0x18] sm:$0xf] %v1887
        %1920 = vst [vmem:[%s261 + $0x1c] sm:$0xf] %v1888
        %1921 = vst [vmem:[%s261 + $0x20] sm:$0xf] %v1889
        %1922 = vst [vmem:[%s261 + $0x24] sm:$0xf] %v1890
        %1923 = vst [vmem:[%s261 + $0x28] sm:$0xf] %v1891
        %1924 = vst [vmem:[%s261 + $0x2c] sm:$0xf] %v1892
        %1925 = vst [vmem:[%s261 + $0x30] sm:$0xf] %v1893
        %1926 = vst [vmem:[%s261 + $0x34] sm:$0xf] %v1894
        %1927 = vst [vmem:[%s261 + $0x38] sm:$0xf] %v1895
        %1928 = vst [vmem:[%s261 + $0x3c] sm:$0xf] %v1896
        %1929 = vst [vmem:[%s261 + $0x40] sm:$0xf] %v1897
        %1930 = vst [vmem:[%s261 + $0x44] sm:$0xf] %v1898
        %1931 = vst [vmem:[%s261 + $0x48] sm:$0xf] %v1899
        %1932 = vst [vmem:[%s261 + $0x4c] sm:$0xf] %v1900
        %1933 = vst [vmem:[%s261 + $0x50] sm:$0xf] %v1901
        %1934 = vst [vmem:[%s261 + $0x54] sm:$0xf] %v1902
        %1935 = vst [vmem:[%s261 + $0x58] sm:$0xf] %v1903
        %1936 = vst [vmem:[%s261 + $0x5c] sm:$0xf] %v1904
        %1937 = vst [vmem:[%s261 + $0x60] sm:$0xf] %v1905
        %1938 = vst [vmem:[%s261 + $0x64] sm:$0xf] %v1906
        %1939 = vst [vmem:[%s261 + $0x68] sm:$0xf] %v1907
        %1940 = vst [vmem:[%s261 + $0x6c] sm:$0xf] %v1908
        %1941 = vst [vmem:[%s261 + $0x70] sm:$0xf] %v1909
        %1942 = vst [vmem:[%s261 + $0x74] sm:$0xf] %v1910
        %1943 = vst [vmem:[%s261 + $0x78] sm:$0xf] %v1911
        %1944 = vst [vmem:[%s261 + $0x7c] sm:$0xf] %v1912
        %v1945 = vpack.c.bf16 %v1535, %v1535
        %v1946 = vpack.c.bf16 %v1537, %v1537
        %v1947 = vpack.c.bf16 %v1540, %v1540
        %v1948 = vpack.c.bf16 %v1542, %v1542
        %v1949 = vpack.c.bf16 %v1545, %v1545
        %v1950 = vpack.c.bf16 %v1547, %v1547
        %v1951 = vpack.c.bf16 %v1550, %v1550
        %v1952 = vpack.c.bf16 %v1552, %v1552
        %v1953 = vpack.c.bf16 %v1555, %v1555
        %v1954 = vpack.c.bf16 %v1557, %v1557
        %v1955 = vpack.c.bf16 %v1560, %v1560
        %v1956 = vpack.c.bf16 %v1562, %v1562
        %v1957 = vpack.c.bf16 %v1565, %v1565
        %v1958 = vpack.c.bf16 %v1567, %v1567
        %v1959 = vpack.c.bf16 %v1570, %v1570
        %v1960 = vpack.c.bf16 %v1572, %v1572
        %v1961 = vpack.c.bf16 %v1575, %v1575
        %v1962 = vpack.c.bf16 %v1577, %v1577
        %v1963 = vpack.c.bf16 %v1580, %v1580
        %v1964 = vpack.c.bf16 %v1582, %v1582
        %v1965 = vpack.c.bf16 %v1585, %v1585
        %v1966 = vpack.c.bf16 %v1587, %v1587
        %v1967 = vpack.c.bf16 %v1590, %v1590
        %v1968 = vpack.c.bf16 %v1592, %v1592
        %v1969 = vpack.c.bf16 %v1595, %v1595
        %v1970 = vpack.c.bf16 %v1597, %v1597
        %v1971 = vpack.c.bf16 %v1600, %v1600
        %v1972 = vpack.c.bf16 %v1602, %v1602
        %v1973 = vpack.c.bf16 %v1605, %v1605
        %v1974 = vpack.c.bf16 %v1607, %v1607
        %v1975 = vpack.c.bf16 %v1610, %v1610
        %v1976 = vpack.c.bf16 %v1612, %v1612
        %1977 = vst [vmem:[%s268] sm:$0xf] %v1945
        %1978 = vst [vmem:[%s268 + $0x4] sm:$0xf] %v1946
        %1979 = vst [vmem:[%s268 + $0x8] sm:$0xf] %v1947
        %1980 = vst [vmem:[%s268 + $0xc] sm:$0xf] %v1948
        %1981 = vst [vmem:[%s268 + $0x10] sm:$0xf] %v1949
        %1982 = vst [vmem:[%s268 + $0x14] sm:$0xf] %v1950
        %1983 = vst [vmem:[%s268 + $0x18] sm:$0xf] %v1951
        %1984 = vst [vmem:[%s268 + $0x1c] sm:$0xf] %v1952
        %1985 = vst [vmem:[%s268 + $0x20] sm:$0xf] %v1953
        %1986 = vst [vmem:[%s268 + $0x24] sm:$0xf] %v1954
        %1987 = vst [vmem:[%s268 + $0x28] sm:$0xf] %v1955
        %1988 = vst [vmem:[%s268 + $0x2c] sm:$0xf] %v1956
        %1989 = vst [vmem:[%s268 + $0x30] sm:$0xf] %v1957
        %1990 = vst [vmem:[%s268 + $0x34] sm:$0xf] %v1958
        %1991 = vst [vmem:[%s268 + $0x38] sm:$0xf] %v1959
        %1992 = vst [vmem:[%s268 + $0x3c] sm:$0xf] %v1960
        %1993 = vst [vmem:[%s268 + $0x40] sm:$0xf] %v1961
        %1994 = vst [vmem:[%s268 + $0x44] sm:$0xf] %v1962
        %1995 = vst [vmem:[%s268 + $0x48] sm:$0xf] %v1963
        %1996 = vst [vmem:[%s268 + $0x4c] sm:$0xf] %v1964
        %1997 = vst [vmem:[%s268 + $0x50] sm:$0xf] %v1965
        %1998 = vst [vmem:[%s268 + $0x54] sm:$0xf] %v1966
        %1999 = vst [vmem:[%s268 + $0x58] sm:$0xf] %v1967
        %2000 = vst [vmem:[%s268 + $0x5c] sm:$0xf] %v1968
        %2001 = vst [vmem:[%s268 + $0x60] sm:$0xf] %v1969
        %2002 = vst [vmem:[%s268 + $0x64] sm:$0xf] %v1970
        %2003 = vst [vmem:[%s268 + $0x68] sm:$0xf] %v1971
        %2004 = vst [vmem:[%s268 + $0x6c] sm:$0xf] %v1972
        %2005 = vst [vmem:[%s268 + $0x70] sm:$0xf] %v1973
        %2006 = vst [vmem:[%s268 + $0x74] sm:$0xf] %v1974
        %2007 = vst [vmem:[%s268 + $0x78] sm:$0xf] %v1975
        %2008 = vst [vmem:[%s268 + $0x7c] sm:$0xf] %v1976
        %v2009 = vpack.c.bf16 %v1802, %v1802
        %v2010 = vpack.c.bf16 %v1804, %v1804
        %v2011 = vpack.c.bf16 %v1807, %v1807
        %v2012 = vpack.c.bf16 %v1809, %v1809
        %v2013 = vpack.c.bf16 %v1812, %v1812
        %v2014 = vpack.c.bf16 %v1814, %v1814
        %v2015 = vpack.c.bf16 %v1817, %v1817
        %v2016 = vpack.c.bf16 %v1819, %v1819
        %v2017 = vpack.c.bf16 %v1822, %v1822
        %v2018 = vpack.c.bf16 %v1824, %v1824
        %v2019 = vpack.c.bf16 %v1827, %v1827
        %v2020 = vpack.c.bf16 %v1829, %v1829
        %v2021 = vpack.c.bf16 %v1832, %v1832
        %v2022 = vpack.c.bf16 %v1834, %v1834
        %v2023 = vpack.c.bf16 %v1837, %v1837
        %v2024 = vpack.c.bf16 %v1839, %v1839
        %v2025 = vpack.c.bf16 %v1842, %v1842
        %v2026 = vpack.c.bf16 %v1844, %v1844
        %v2027 = vpack.c.bf16 %v1847, %v1847
        %v2028 = vpack.c.bf16 %v1849, %v1849
        %v2029 = vpack.c.bf16 %v1852, %v1852
        %v2030 = vpack.c.bf16 %v1854, %v1854
        %v2031 = vpack.c.bf16 %v1857, %v1857
        %v2032 = vpack.c.bf16 %v1859, %v1859
        %v2033 = vpack.c.bf16 %v1862, %v1862
        %v2034 = vpack.c.bf16 %v1864, %v1864
        %v2035 = vpack.c.bf16 %v1867, %v1867
        %v2036 = vpack.c.bf16 %v1869, %v1869
        %v2037 = vpack.c.bf16 %v1872, %v1872
        %v2038 = vpack.c.bf16 %v1874, %v1874
        %v2039 = vpack.c.bf16 %v1877, %v1877
        %v2040 = vpack.c.bf16 %v1879, %v1879
        %2041 = vst [vmem:[%s275] sm:$0xf] %v2009
        %2042 = vst [vmem:[%s275 + $0x4] sm:$0xf] %v2010
        %2043 = vst [vmem:[%s275 + $0x8] sm:$0xf] %v2011
        %2044 = vst [vmem:[%s275 + $0xc] sm:$0xf] %v2012
        %2045 = vst [vmem:[%s275 + $0x10] sm:$0xf] %v2013
        %2046 = vst [vmem:[%s275 + $0x14] sm:$0xf] %v2014
        %2047 = vst [vmem:[%s275 + $0x18] sm:$0xf] %v2015
        %2048 = vst [vmem:[%s275 + $0x1c] sm:$0xf] %v2016
        %2049 = vst [vmem:[%s275 + $0x20] sm:$0xf] %v2017
        %2050 = vst [vmem:[%s275 + $0x24] sm:$0xf] %v2018
        %2051 = vst [vmem:[%s275 + $0x28] sm:$0xf] %v2019
        %2052 = vst [vmem:[%s275 + $0x2c] sm:$0xf] %v2020
        %2053 = vst [vmem:[%s275 + $0x30] sm:$0xf] %v2021
        %2054 = vst [vmem:[%s275 + $0x34] sm:$0xf] %v2022
        %2055 = vst [vmem:[%s275 + $0x38] sm:$0xf] %v2023
        %2056 = vst [vmem:[%s275 + $0x3c] sm:$0xf] %v2024
        %2057 = vst [vmem:[%s275 + $0x40] sm:$0xf] %v2025
        %2058 = vst [vmem:[%s275 + $0x44] sm:$0xf] %v2026
        %2059 = vst [vmem:[%s275 + $0x48] sm:$0xf] %v2027
        %2060 = vst [vmem:[%s275 + $0x4c] sm:$0xf] %v2028
        %2061 = vst [vmem:[%s275 + $0x50] sm:$0xf] %v2029
        %2062 = vst [vmem:[%s275 + $0x54] sm:$0xf] %v2030
        %2063 = vst [vmem:[%s275 + $0x58] sm:$0xf] %v2031
        %2064 = vst [vmem:[%s275 + $0x5c] sm:$0xf] %v2032
        %2065 = vst [vmem:[%s275 + $0x60] sm:$0xf] %v2033
        %2066 = vst [vmem:[%s275 + $0x64] sm:$0xf] %v2034
        %2067 = vst [vmem:[%s275 + $0x68] sm:$0xf] %v2035
        %2068 = vst [vmem:[%s275 + $0x6c] sm:$0xf] %v2036
        %2069 = vst [vmem:[%s275 + $0x70] sm:$0xf] %v2037
        %2070 = vst [vmem:[%s275 + $0x74] sm:$0xf] %v2038
        %2071 = vst [vmem:[%s275 + $0x78] sm:$0xf] %v2039
        %2072 = vst [vmem:[%s275 + $0x7c] sm:$0xf] %v2040
        %s2073 = sand.u32 %s97, 1
        %s2074 = scalar_lea.sflag [#allocation4], %s2073
        %s2075 = sand.u32 %s97, 1
        %s2076 = smul.addr %s2075, 128
        %s2077 = scalar_lea.vmem [#allocation7], %s2076
        %s2078 = sand.u32 %s26, 1
        %s2079 = scalar_lea.sflag [#allocation9], %s2078
        %s2080 = sand.u32 %s125, 1
        %s2081 = smul.addr %s2080, 128
        %s2082 = scalar_lea.vmem [#allocation8], %s2081
        %s2083 = sand.u32 %s26, 1
        %s2084 = scalar_lea.sflag [#allocation9], %s2083
        %s2085 = sand.u32 %s153, 1
        %s2086 = smul.addr %s2085, 128
        %s2087 = scalar_lea.vmem [#allocation10], %s2086
        // Predicated region
        $region37: #{tpu_custom_call.1} parent=27 // pred_check
          %p2088 = pneg %p107
        $region38: #{tpu_custom_call.1} parent=27 // pred_check_branch
          %2090 = sbr.rel (%p2088) target = $region40
        $region39: #{tpu_custom_call.1} parent=27 // pred_region
          %s2091 = smul.u32 32, %s31
          %2093 = vsyncadd %s2074, 0
          %s2094 = smul.addr %s30, 32
          %s2095 = sadd.s32 %s2091, %s2094
          %s2096 = smul.addr %s2095, 4
          %s2097 = scalar_lea.hbm %s2, %s2096
          %s2098 = sshll.u32 %s2077, 4
          %s2099 = int_to_ptr.vmem [resolvable:$true] %s2098
          %s2100 = sshll.u32 %s2097, 4
          %s2101 = int_to_ptr.hbm [resolvable:$true] %s2100
          %2106 = dma.vmem_to_hbm [thread:$0]  %s2099, 2048, %s2101, %s2074, 64, 64, 4
        $region40: #{tpu_custom_call.1} parent=27 // pred_fallthru
          _
        // Predicated region
        $region41: #{tpu_custom_call.1} parent=27 // pred_check
          %p2107 = pneg %p135
        $region42: #{tpu_custom_call.1} parent=27 // pred_check_branch
          %2109 = sbr.rel (%p2107) target = $region44
        $region43: #{tpu_custom_call.1} parent=27 // pred_region
          %s2110 = smul.u32 32, %s31
          %2112 = vsyncadd %s2079, 0
          %s2113 = smul.addr %s30, 32
          %s2114 = sadd.s32 %s2110, %s2113
          %s2115 = smul.addr %s2114, 4
          %s2116 = scalar_lea.hbm %s3, %s2115
          %s2117 = sshll.u32 %s2082, 4
          %s2118 = int_to_ptr.vmem [resolvable:$true] %s2117
          %s2119 = sshll.u32 %s2116, 4
          %s2120 = int_to_ptr.hbm [resolvable:$true] %s2119
          %2125 = dma.vmem_to_hbm [thread:$0]  %s2118, 2048, %s2120, %s2079, 64, 64, 4
        $region44: #{tpu_custom_call.1} parent=27 // pred_fallthru
          _
        // Predicated region
        $region45: #{tpu_custom_call.1} parent=27 // pred_check
          %p2126 = pneg %p163
        $region46: #{tpu_custom_call.1} parent=27 // pred_check_branch
          %2128 = sbr.rel (%p2126) target = $region48
        $region47: #{tpu_custom_call.1} parent=27 // pred_region
          %s2129 = smul.u32 32, %s31
          %2131 = vsyncadd %s2084, 0
          %s2132 = smul.addr %s30, 32
          %s2133 = sadd.s32 %s2129, %s2132
          %s2134 = smul.addr %s2133, 4
          %s2135 = scalar_lea.hbm %s4, %s2134
          %s2136 = sshll.u32 %s2087, 4
          %s2137 = int_to_ptr.vmem [resolvable:$true] %s2136
          %s2138 = sshll.u32 %s2135, 4
          %s2139 = int_to_ptr.hbm [resolvable:$true] %s2138
          %2144 = dma.vmem_to_hbm [thread:$0]  %s2137, 2048, %s2139, %s2084, 64, 64, 4
        $region48: #{tpu_custom_call.1} parent=27 // pred_fallthru
          _
      $region28: #{tpu_custom_call.1} parent=5 // pred_fallthru
        _
      %p2145 = scmp.le.s32.totalorder 2, %s21
      // Predicated region
      $region49: #{tpu_custom_call.1} parent=5 // pred_check
        %p2146 = pneg %p2145
      $region50: #{tpu_custom_call.1} parent=5 // pred_check_branch
        %2148 = sbr.rel (%p2146) target = $region52
      $region51: #{tpu_custom_call.1} parent=5 // pred_region
        %s2149 = ssub.s32 %s21, 2
        // Predicated region
        $region53: #{tpu_custom_call.1} parent=51 // pred_check
          %p2150 = pneg %p113
        $region54: #{tpu_custom_call.1} parent=51 // pred_check_branch
          %2152 = sbr.rel (%p2150) target = $region56
        $region55: #{tpu_custom_call.1} parent=51 // pred_region
          %s2153 = sand.u32 %s98, 1
          %s2154 = scalar_lea.sflag [#allocation4], %s2153
          %s2155 = sand.u32 %s98, 1
          %s2156 = smul.addr %s2155, 128
          %s2157 = scalar_lea.vmem [#allocation7], %s2156
          %2159 = dma.done %s2154, 2048
        $region56: #{tpu_custom_call.1} parent=51 // pred_fallthru
          _
        // Predicated region
        $region57: #{tpu_custom_call.1} parent=51 // pred_check
          %p2160 = pneg %p141
        $region58: #{tpu_custom_call.1} parent=51 // pred_check_branch
          %2162 = sbr.rel (%p2160) target = $region60
        $region59: #{tpu_custom_call.1} parent=51 // pred_region
          %s2163 = sand.u32 %s27, 1
          %s2164 = scalar_lea.sflag [#allocation9], %s2163
          %s2165 = sand.u32 %s126, 1
          %s2166 = smul.addr %s2165, 128
          %s2167 = scalar_lea.vmem [#allocation8], %s2166
          %2169 = dma.done %s2164, 2048
        $region60: #{tpu_custom_call.1} parent=51 // pred_fallthru
          _
        // Predicated region
        $region61: #{tpu_custom_call.1} parent=51 // pred_check
          %p2170 = pneg %p169
        $region62: #{tpu_custom_call.1} parent=51 // pred_check_branch
          %2172 = sbr.rel (%p2170) target = $region64
        $region63: #{tpu_custom_call.1} parent=51 // pred_region
          %s2173 = sand.u32 %s27, 1
          %s2174 = scalar_lea.sflag [#allocation9], %s2173
          %s2175 = sand.u32 %s154, 1
          %s2176 = smul.addr %s2175, 128
          %s2177 = scalar_lea.vmem [#allocation10], %s2176
          %2179 = dma.done %s2174, 2048
        $region64: #{tpu_custom_call.1} parent=51 // pred_fallthru
          _
      $region52: #{tpu_custom_call.1} parent=5 // pred_fallthru
        _
    $region6: #{tpu_custom_call.1} parent=1 // loop_footer
      %s25 = sadd.s32 1, %s21
    $region7: #{tpu_custom_call.1} parent=1 // loop_footer_branch
      %20 = sbr.rel target = $region3
    $region8: #{tpu_custom_call.1} parent=1 // loop_exit
      _
    %2180 = vsyncpa [#allocation3], 1
    %s2181 = scalar_lea.sflag [#allocation3], 1
    %2182 = vsyncpa %s2181, 1
    %2183 = vsyncpa [#allocation6], 1
    %2184 = vsyncpa [#allocation4], 1
    %s2185 = scalar_lea.sflag [#allocation4], 1
    %2186 = vsyncpa %s2185, 1
    %2187 = vsyncpa [#allocation9], 1
    %s2188 = scalar_lea.sflag [#allocation9], 1
    %2189 = vsyncpa %s2188, 1

</llo_original>
